<compile_context>
chip_gen: v5e
topology: v5e:2x2
jax: 0.10.0
libtpu: 0.0.40
codegen_flags: <defaults>
</compile_context>

<pallas_src>
import functools
import math

import jax
import jax.numpy as jnp
from jax.experimental import pallas as pl
from jax.experimental.pallas import tpu as pltpu


_VMEM_LIMIT = 48 * 1024 * 1024  # safe headroom on v7x (64 MiB physical)


def _fit_tile(dim, target):
    """Largest tile <= target that divides dim (full dim if dim <= target)."""
    if dim <= target:
        return dim
    t = target
    while t > 1 and dim % t != 0:
        t //= 2
    return t if dim % t == 0 else dim


# ----------------------------- Pallas kernels ------------------------------


def _matmul_kernel(x_ref, w_ref, b_ref, o_ref, acc_ref, *, activation):
    @pl.when(pl.program_id(2) == 0)
    def _():
        acc_ref[...] = jnp.zeros_like(acc_ref)

    acc_ref[...] += jnp.dot(x_ref[...], w_ref[...],
                            preferred_element_type=jnp.float32)

    @pl.when(pl.program_id(2) == pl.num_programs(2) - 1)
    def _():
        h = acc_ref[...] + b_ref[...]
        if activation == "gelu":
            # TODO(synk): HF RoBERTa uses exact erf-GELU; tanh approximation here.
            h = jax.nn.gelu(h, approximate=True)
        o_ref[...] = h.astype(o_ref.dtype)


def _matmul_res_ln_kernel(x_ref, w_ref, b_ref, r_ref, g_ref, bb_ref,
                          o_ref, acc_ref, *, eps):
    kk = pl.program_id(1)

    @pl.when(kk == 0)
    def _():
        acc_ref[...] = jnp.zeros_like(acc_ref)

    acc_ref[...] += jnp.dot(x_ref[...], w_ref[...],
                            preferred_element_type=jnp.float32)

    @pl.when(kk == pl.num_programs(1) - 1)
    def _():
        h = acc_ref[...] + b_ref[...] + r_ref[...].astype(jnp.float32)
        mu = jnp.mean(h, axis=-1, keepdims=True)
        var = jnp.mean(jnp.square(h - mu), axis=-1, keepdims=True)
        o_ref[...] = ((h - mu) * jax.lax.rsqrt(var + eps) * g_ref[...]
                      + bb_ref[...]).astype(o_ref.dtype)


def _layernorm_kernel(x_ref, g_ref, b_ref, o_ref, *, eps):
    x = x_ref[...].astype(jnp.float32)
    mu = jnp.mean(x, axis=-1, keepdims=True)
    var = jnp.mean(jnp.square(x - mu), axis=-1, keepdims=True)
    o_ref[...] = ((x - mu) * jax.lax.rsqrt(var + eps) * g_ref[...]
                  + b_ref[...]).astype(o_ref.dtype)


def _attention_kernel(qkv_ref, m_ref, o_ref, *, num_heads, head_dim, scale):
    # One batch element per grid step; all heads processed here and written as a
    # single lane-dense (S, hidden) store.
    qkv = qkv_ref[0]              # (S, 3*hidden) bf16
    mask = m_ref[0]               # (1, S) additive f32
    hidden = num_heads * head_dim
    outs = []
    for h in range(num_heads):
        lo = h * head_dim
        q = qkv[:, lo:lo + head_dim]
        k = qkv[:, hidden + lo:hidden + lo + head_dim]
        v = qkv[:, 2 * hidden + lo:2 * hidden + lo + head_dim]
        s = jax.lax.dot_general(q, k, (((1,), (1,)), ((), ())),
                                preferred_element_type=jnp.float32)
        s = s * scale + mask
        s = s - jnp.max(s, axis=-1, keepdims=True)
        p = jnp.exp(s)
        p = p * pl.reciprocal(jnp.sum(p, axis=-1, keepdims=True), approx=True)
        outs.append(jnp.dot(p.astype(v.dtype), v,
                            preferred_element_type=jnp.float32))
    o_ref[0] = jnp.concatenate(outs, axis=-1).astype(o_ref.dtype)


# ------------------------------ Pallas wrappers -----------------------------


def linear(x2d, w, b, activation=None):
    m, k = x2d.shape
    n = w.shape[1]
    tm = _fit_tile(m, 256)
    tn = _fit_tile(n, 512)
    tk = _fit_tile(k, 512)
    kernel = functools.partial(_matmul_kernel, activation=activation)
    return pl.pallas_call(
        kernel,
        out_shape=jax.ShapeDtypeStruct((m, n), jnp.bfloat16),
        grid=(m // tm, n // tn, k // tk),
        in_specs=[
            pl.BlockSpec((tm, tk), lambda i, j, kk: (i, kk)),
            pl.BlockSpec((tk, tn), lambda i, j, kk: (kk, j)),
            pl.BlockSpec((1, tn), lambda i, j, kk: (0, j)),
        ],
        out_specs=pl.BlockSpec((tm, tn), lambda i, j, kk: (i, j)),
        scratch_shapes=[pltpu.VMEM((tm, tn), jnp.float32)],
        compiler_params=pltpu.CompilerParams(
            dimension_semantics=("parallel", "parallel", "arbitrary"),
            vmem_limit_bytes=_VMEM_LIMIT,
        ),
    )(x2d, w, b.reshape(1, n))


def linear_res_layernorm(x2d, w, b, res2d, gamma, beta, eps=1e-5):
    """out = LayerNorm(x2d @ w + b + res2d); N (= hidden) kept whole for the LN."""
    m, k = x2d.shape
    n = w.shape[1]
    tm = _fit_tile(m, 256)
    tk = _fit_tile(k, 512)
    kernel = functools.partial(_matmul_res_ln_kernel, eps=eps)
    return pl.pallas_call(
        kernel,
        out_shape=jax.ShapeDtypeStruct((m, n), jnp.bfloat16),
        grid=(m // tm, k // tk),
        in_specs=[
            pl.BlockSpec((tm, tk), lambda i, kk: (i, kk)),
            pl.BlockSpec((tk, n), lambda i, kk: (kk, 0)),
            pl.BlockSpec((1, n), lambda i, kk: (0, 0)),
            pl.BlockSpec((tm, n), lambda i, kk: (i, 0)),
            pl.BlockSpec((1, n), lambda i, kk: (0, 0)),
            pl.BlockSpec((1, n), lambda i, kk: (0, 0)),
        ],
        out_specs=pl.BlockSpec((tm, n), lambda i, kk: (i, 0)),
        scratch_shapes=[pltpu.VMEM((tm, n), jnp.float32)],
        compiler_params=pltpu.CompilerParams(
            dimension_semantics=("parallel", "arbitrary"),
            vmem_limit_bytes=_VMEM_LIMIT,
        ),
    )(x2d, w, b.reshape(1, n), res2d, gamma.reshape(1, n), beta.reshape(1, n))


def layernorm(x2d, gamma, beta, eps=1e-5):
    m, d = x2d.shape
    tm = _fit_tile(m, 256)
    kernel = functools.partial(_layernorm_kernel, eps=eps)
    return pl.pallas_call(
        kernel,
        out_shape=jax.ShapeDtypeStruct((m, d), jnp.bfloat16),
        grid=(m // tm,),
        in_specs=[
            pl.BlockSpec((tm, d), lambda i: (i, 0)),
            pl.BlockSpec((1, d), lambda i: (0, 0)),
            pl.BlockSpec((1, d), lambda i: (0, 0)),
        ],
        out_specs=pl.BlockSpec((tm, d), lambda i: (i, 0)),
        compiler_params=pltpu.CompilerParams(
            dimension_semantics=("parallel",),
            vmem_limit_bytes=_VMEM_LIMIT,
        ),
    )(x2d, gamma.reshape(1, d), beta.reshape(1, d))


def attention(qkv3, add_mask, num_heads, head_dim):
    b, s, three_h = qkv3.shape
    hidden = num_heads * head_dim
    kernel = functools.partial(
        _attention_kernel, num_heads=num_heads, head_dim=head_dim,
        scale=1.0 / math.sqrt(head_dim))
    return pl.pallas_call(
        kernel,
        out_shape=jax.ShapeDtypeStruct((b, s, hidden), jnp.bfloat16),
        grid=(b,),
        in_specs=[
            pl.BlockSpec((1, s, three_h), lambda bi: (bi, 0, 0)),
            pl.BlockSpec((1, 1, s), lambda bi: (bi, 0, 0)),
        ],
        out_specs=pl.BlockSpec((1, s, hidden), lambda bi: (bi, 0, 0)),
        compiler_params=pltpu.CompilerParams(
            dimension_semantics=("parallel",),
            vmem_limit_bytes=_VMEM_LIMIT,
        ),
    )(qkv3, add_mask)


# ------------------------------ model definition ----------------------------


def init_params(key, cfg):
    h = cfg["hidden"]
    inter = cfg["inter"]
    std = 0.02
    keys = iter(jax.random.split(key, 4 + 8 * cfg["layers"]))

    def norm(shape, dtype=jnp.bfloat16):
        return (std * jax.random.normal(next(keys), shape,
                                        dtype=jnp.float32)).astype(dtype)

    params = {
        "word_emb": norm((cfg["vocab"], h), jnp.float32),
        "pos_emb": norm((cfg["max_pos"], h), jnp.float32),
        "type_emb": norm((1, h), jnp.float32),
        "emb_ln_g": jnp.ones((h,), jnp.float32),
        "emb_ln_b": jnp.zeros((h,), jnp.float32),
        "layers": [],
    }
    for _ in range(cfg["layers"]):
        params["layers"].append({
            # fused Q|K|V projection
            "wqkv": norm((h, 3 * h)), "bqkv": jnp.zeros((3 * h,), jnp.float32),
            "wo": norm((h, h)), "bo": jnp.zeros((h,), jnp.float32),
            "ln1_g": jnp.ones((h,), jnp.float32),
            "ln1_b": jnp.zeros((h,), jnp.float32),
            "w1": norm((h, inter)), "b1": jnp.zeros((inter,), jnp.float32),
            "w2": norm((inter, h)), "b2": jnp.zeros((h,), jnp.float32),
            "ln2_g": jnp.ones((h,), jnp.float32),
            "ln2_b": jnp.zeros((h,), jnp.float32),
        })
    return params


def encoder_layer(p, x2d, add_mask, batch, seq, num_heads, hidden):
    head_dim = hidden // num_heads

    # Fused QKV projection: one matmul, one HBM read of x2d.
    qkv = linear(x2d, p["wqkv"], p["bqkv"])                 # (B*S, 3H)
    qkv3 = qkv.reshape(batch, seq, 3 * hidden)              # no transpose

    ctx = attention(qkv3, add_mask, num_heads, head_dim)    # (B, S, H)
    ctx2d = ctx.reshape(batch * seq, hidden)                # no transpose

    # Attention output projection fused with residual + LayerNorm.
    x2d = linear_res_layernorm(ctx2d, p["wo"], p["bo"], x2d,
                               p["ln1_g"], p["ln1_b"], eps=1e-5)

    # FFN: up-projection + GELU, then down-projection fused with res + LN.
    ffn = linear(x2d, p["w1"], p["b1"], activation="gelu")
    x2d = linear_res_layernorm(ffn, p["w2"], p["b2"], x2d,
                               p["ln2_g"], p["ln2_b"], eps=1e-5)
    return x2d


def roberta_encode(params, input_ids, attention_mask, cfg):
    batch, seq = input_ids.shape
    hidden = cfg["hidden"]

    # Embedding gathers are glue (plain JAX, fused under jit).  Position ids
    # follow HF RoBERTa: cumsum(mask)*mask + padding_idx (padding_idx = 1).
    mask_i = attention_mask.astype(jnp.int32)
    positions = jnp.cumsum(mask_i, axis=1) * mask_i + 1
    x = (
        params["word_emb"][input_ids]
        + params["pos_emb"][positions]
        + params["type_emb"][0][None, None, :]
    ).astype(jnp.float32)

    x2d = x.reshape(batch * seq, hidden)
    x2d = layernorm(x2d, params["emb_ln_g"], params["emb_ln_b"], eps=1e-5)

    add_mask = ((1.0 - attention_mask.astype(jnp.float32)) * -1e9)[:, None, :]

    for layer in params["layers"]:
        x2d = encoder_layer(layer, x2d, add_mask, batch, seq,
                            cfg["heads"], hidden)

    return x2d.reshape(batch, seq, hidden)


def roberta_sim_forward(params, input_ids_1, input_ids_2,
                        attention_mask_1, attention_mask_2, *, cfg):
    """Mirrors RobertaSim.forward: returns (last_hidden_state_1, last_hidden_state_2).

    The two encoder passes share weights, so they are run as one batched pass
    (concat along batch) and the result is split — identical math, half the
    weight DMAs and pallas_call count.
    """
    b = input_ids_1.shape[0]
    ids = jnp.concatenate([input_ids_1, input_ids_2], axis=0)
    masks = jnp.concatenate([attention_mask_1, attention_mask_2], axis=0)
    out = roberta_encode(params, ids, masks, cfg).astype(jnp.float32)
    return out[:b], out[b:]


# ----------------------------------- main -----------------------------------


if __name__ == "__main__":
    cfg = dict(vocab=100, hidden=32, heads=4, inter=64, layers=2, max_pos=64)
    B, S = 2, 8

    key = jax.random.PRNGKey(0)
    pkey, ikey1, ikey2 = jax.random.split(key, 3)

    params = init_params(pkey, cfg)

    input_ids_1 = jax.random.randint(ikey1, (B, S), 3, cfg["vocab"], dtype=jnp.int32)
    input_ids_2 = jax.random.randint(ikey2, (B, S), 3, cfg["vocab"], dtype=jnp.int32)
    attention_mask_1 = jnp.ones((B, S), dtype=jnp.int32)
    attention_mask_2 = jnp.concatenate(
        [jnp.ones((B, S - 2), jnp.int32), jnp.zeros((B, 2), jnp.int32)], axis=1
    )

    fwd = jax.jit(functools.partial(roberta_sim_forward, cfg=cfg))
    l_h1, l_h2 = fwd(params, input_ids_1, input_ids_2,
                     attention_mask_1, attention_mask_2)
    jax.block_until_ready((l_h1, l_h2))

    assert l_h1.shape == (B, S, cfg["hidden"])
    assert l_h2.shape == (B, S, cfg["hidden"])
    print("KERNEL_OK")
</pallas_src>

<mosaic_0001>
module attributes {stable_mosaic.version = 11 : i64} {
  func.func @_layernorm_kernel(%arg0: i32, %arg1: memref<32x32xf32, #tpu.memory_space<vmem>>, %arg2: memref<1x32xf32, #tpu.memory_space<vmem>>, %arg3: memref<1x32xf32, #tpu.memory_space<vmem>>, %arg4: memref<32x32xbf16, #tpu.memory_space<vmem>>) attributes {dimension_semantics = [#tpu.dimension_semantics<parallel>], iteration_bounds = array<i64: 1>, scalar_prefetch = 0 : i64, scratch_operands = 0 : i64, tpu.core_type = #tpu.core_type<tc>, window_params = [{transform_indices = @transform_0, window_bounds = array<i64: 32, 32>}, {pipeline_mode = #tpu.pipeline_mode<synchronous>, transform_indices = @transform_1, window_bounds = array<i64: 1, 32>}, {pipeline_mode = #tpu.pipeline_mode<synchronous>, transform_indices = @transform_2, window_bounds = array<i64: 1, 32>}, {transform_indices = @transform_3, window_bounds = array<i64: 32, 32>}]} {
    %c0 = arith.constant 0 : index
    %c0_0 = arith.constant 0 : index
    %0 = vector.load %arg1[%c0, %c0_0] : memref<32x32xf32, #tpu.memory_space<vmem>>, vector<32x32xf32>
    %cst = arith.constant dense<0.000000e+00> : vector<32xf32>
    %1 = vector.multi_reduction <add>, %0, %cst [1] : vector<32x32xf32> to vector<32xf32>
    %2 = vector.shape_cast %1 : vector<32xf32> to vector<32x1xf32>
    %cst_1 = arith.constant 3.200000e+01 : f32
    %3 = vector.broadcast %cst_1 : f32 to vector<32x1xf32>
    %4 = arith.divf %2, %3 : vector<32x1xf32>
    %5 = vector.broadcast %4 : vector<32x1xf32> to vector<32x32xf32>
    %6 = arith.subf %0, %5 : vector<32x32xf32>
    %7 = arith.mulf %6, %6 : vector<32x32xf32>
    %cst_2 = arith.constant dense<0.000000e+00> : vector<32xf32>
    %8 = vector.multi_reduction <add>, %7, %cst_2 [1] : vector<32x32xf32> to vector<32xf32>
    %9 = vector.shape_cast %8 : vector<32xf32> to vector<32x1xf32>
    %cst_3 = arith.constant 3.200000e+01 : f32
    %10 = vector.broadcast %cst_3 : f32 to vector<32x1xf32>
    %11 = arith.divf %9, %10 : vector<32x1xf32>
    %12 = vector.broadcast %4 : vector<32x1xf32> to vector<32x32xf32>
    %13 = arith.subf %0, %12 : vector<32x32xf32>
    %cst_4 = arith.constant 9.99999974E-6 : f32
    %14 = vector.broadcast %cst_4 : f32 to vector<32x1xf32>
    %15 = arith.addf %11, %14 : vector<32x1xf32>
    %16 = math.rsqrt %15 : vector<32x1xf32>
    %17 = vector.broadcast %16 : vector<32x1xf32> to vector<32x32xf32>
    %18 = arith.mulf %13, %17 : vector<32x32xf32>
    %c0_5 = arith.constant 0 : index
    %c0_6 = arith.constant 0 : index
    %19 = vector.load %arg2[%c0_5, %c0_6] : memref<1x32xf32, #tpu.memory_space<vmem>>, vector<1x32xf32>
    %20 = vector.broadcast %19 : vector<1x32xf32> to vector<32x32xf32>
    %21 = arith.mulf %18, %20 : vector<32x32xf32>
    %c0_7 = arith.constant 0 : index
    %c0_8 = arith.constant 0 : index
    %22 = vector.load %arg3[%c0_7, %c0_8] : memref<1x32xf32, #tpu.memory_space<vmem>>, vector<1x32xf32>
    %23 = vector.broadcast %22 : vector<1x32xf32> to vector<32x32xf32>
    %24 = arith.addf %21, %23 : vector<32x32xf32>
    %25 = arith.truncf %24 : vector<32x32xf32> to vector<32x32xbf16>
    %c0_9 = arith.constant 0 : index
    %c0_10 = arith.constant 0 : index
    %26 = vector.load %arg4[%c0_9, %c0_10] : memref<32x32xbf16, #tpu.memory_space<vmem>>, vector<32x32xbf16>
    tpu.vector_store %arg4[%c0_9, %c0_10], %25 {strides = array<i32>} : memref<32x32xbf16, #tpu.memory_space<vmem>>, vector<32x32xbf16>,
    return
  }
  func.func @transform_0(%arg0: i32) -> (i32, i32) {
    %c0_i32 = arith.constant 0 : i32
    %c0_i32_0 = arith.constant 0 : i32
    return %arg0, %c0_i32 : i32, i32
  }
  func.func @transform_1(%arg0: i32) -> (i32, i32) {
    %c0_i32 = arith.constant 0 : i32
    %c0_i32_0 = arith.constant 0 : i32
    %c0_i32_1 = arith.constant 0 : i32
    return %c0_i32, %c0_i32_0 : i32, i32
  }
  func.func @transform_2(%arg0: i32) -> (i32, i32) {
    %c0_i32 = arith.constant 0 : i32
    %c0_i32_0 = arith.constant 0 : i32
    %c0_i32_1 = arith.constant 0 : i32
    return %c0_i32, %c0_i32_0 : i32, i32
  }
  func.func @transform_3(%arg0: i32) -> (i32, i32) {
    %c0_i32 = arith.constant 0 : i32
    %c0_i32_0 = arith.constant 0 : i32
    return %arg0, %c0_i32 : i32, i32
  }
}

module attributes {stable_mosaic.version = 11 : i64} {
  func.func @_matmul_kernel(%arg0: i32, %arg1: i32, %arg2: i32, %arg3: memref<32x32xbf16, #tpu.memory_space<vmem>>, %arg4: memref<32x96xbf16, #tpu.memory_space<vmem>>, %arg5: memref<1x96xf32, #tpu.memory_space<vmem>>, %arg6: memref<32x96xbf16, #tpu.memory_space<vmem>>, %arg7: memref<32x96xf32, #tpu.memory_space<vmem>>) attributes {dimension_semantics = [#tpu.dimension_semantics<parallel>, #tpu.dimension_semantics<parallel>, #tpu.dimension_semantics<arbitrary>], iteration_bounds = array<i64: 1, 1, 1>, scalar_prefetch = 0 : i64, scratch_operands = 1 : i64, tpu.core_type = #tpu.core_type<tc>, window_params = [{transform_indices = @transform_0, window_bounds = array<i64: 32, 32>}, {transform_indices = @transform_1, window_bounds = array<i64: 32, 96>}, {transform_indices = @transform_2, window_bounds = array<i64: 1, 96>}, {transform_indices = @transform_3, window_bounds = array<i64: 32, 96>}]} {
    %c0_i32 = arith.constant 0 : i32
    %0 = arith.cmpi eq, %arg2, %c0_i32 : i32
    %1 = arith.extui %0 : i1 to i32
    %c0_i32_0 = arith.constant 0 : i32
    %2 = arith.cmpi ne, %1, %c0_i32_0 : i32
    scf.if %2 {
      %cst_10 = arith.constant 0.000000e+00 : f32
      %12 = vector.broadcast %cst_10 : f32 to vector<32x96xf32>
      %c0_11 = arith.constant 0 : index
      %c0_12 = arith.constant 0 : index
      %13 = vector.load %arg7[%c0_11, %c0_12] : memref<32x96xf32, #tpu.memory_space<vmem>>, vector<32x96xf32>
      tpu.vector_store %arg7[%c0_11, %c0_12], %12 {strides = array<i32>} : memref<32x96xf32, #tpu.memory_space<vmem>>, vector<32x96xf32>,
    } else {
    }
    %c0 = arith.constant 0 : index
    %c0_1 = arith.constant 0 : index
    %3 = vector.load %arg7[%c0, %c0_1] : memref<32x96xf32, #tpu.memory_space<vmem>>, vector<32x96xf32>
    %c0_2 = arith.constant 0 : index
    %c0_3 = arith.constant 0 : index
    %4 = vector.load %arg3[%c0_2, %c0_3] : memref<32x32xbf16, #tpu.memory_space<vmem>>, vector<32x32xbf16>
    %c0_4 = arith.constant 0 : index
    %c0_5 = arith.constant 0 : index
    %5 = vector.load %arg4[%c0_4, %c0_5] : memref<32x96xbf16, #tpu.memory_space<vmem>>, vector<32x96xbf16>
    %cst = arith.constant dense<0.000000e+00> : vector<32x96xf32>
    %6 = tpu.matmul %4, %5, %cst {dimension_numbers = #tpu.dot_dimension_numbers<[1], [0], [0], [1], [0, 0, 1, 1], [], []>} : vector<32x32xbf16>, vector<32x96xbf16>, vector<32x96xf32> -> vector<32x96xf32>
    %7 = arith.addf %3, %6 : vector<32x96xf32>
    %c0_6 = arith.constant 0 : index
    %c0_7 = arith.constant 0 : index
    %8 = vector.load %arg7[%c0_6, %c0_7] : memref<32x96xf32, #tpu.memory_space<vmem>>, vector<32x96xf32>
    tpu.vector_store %arg7[%c0_6, %c0_7], %7 {strides = array<i32>} : memref<32x96xf32, #tpu.memory_space<vmem>>, vector<32x96xf32>,
    %c0_i32_8 = arith.constant 0 : i32
    %9 = arith.cmpi eq, %arg2, %c0_i32_8 : i32
    %10 = arith.extui %9 : i1 to i32
    %c0_i32_9 = arith.constant 0 : i32
    %11 = arith.cmpi ne, %10, %c0_i32_9 : i32
    scf.if %11 {
      %c0_10 = arith.constant 0 : index
      %c0_11 = arith.constant 0 : index
      %12 = vector.load %arg7[%c0_10, %c0_11] : memref<32x96xf32, #tpu.memory_space<vmem>>, vector<32x96xf32>
      %c0_12 = arith.constant 0 : index
      %c0_13 = arith.constant 0 : index
      %13 = vector.load %arg5[%c0_12, %c0_13] : memref<1x96xf32, #tpu.memory_space<vmem>>, vector<1x96xf32>
      %14 = vector.broadcast %13 : vector<1x96xf32> to vector<32x96xf32>
      %15 = arith.addf %12, %14 : vector<32x96xf32>
      %16 = arith.truncf %15 : vector<32x96xf32> to vector<32x96xbf16>
      %c0_14 = arith.constant 0 : index
      %c0_15 = arith.constant 0 : index
      %17 = vector.load %arg6[%c0_14, %c0_15] : memref<32x96xbf16, #tpu.memory_space<vmem>>, vector<32x96xbf16>
      tpu.vector_store %arg6[%c0_14, %c0_15], %16 {strides = array<i32>} : memref<32x96xbf16, #tpu.memory_space<vmem>>, vector<32x96xbf16>,
    } else {
    }
    return
  }
  func.func @transform_0(%arg0: i32, %arg1: i32, %arg2: i32) -> (i32, i32) {
    %c0_i32 = arith.constant 0 : i32
    return %arg0, %arg2 : i32, i32
  }
  func.func @transform_1(%arg0: i32, %arg1: i32, %arg2: i32) -> (i32, i32) {
    %c0_i32 = arith.constant 0 : i32
    return %arg2, %arg1 : i32, i32
  }
  func.func @transform_2(%arg0: i32, %arg1: i32, %arg2: i32) -> (i32, i32) {
    %c0_i32 = arith.constant 0 : i32
    %c0_i32_0 = arith.constant 0 : i32
    return %c0_i32, %arg1 : i32, i32
  }
  func.func @transform_3(%arg0: i32, %arg1: i32, %arg2: i32) -> (i32, i32) {
    %c0_i32 = arith.constant 0 : i32
    return %arg0, %arg1 : i32, i32
  }
}

module attributes {stable_mosaic.version = 11 : i64} {
  func.func @_matmul_res_ln_kernel(%arg0: i32, %arg1: i32, %arg2: memref<32x32xbf16, #tpu.memory_space<vmem>>, %arg3: memref<32x32xbf16, #tpu.memory_space<vmem>>, %arg4: memref<1x32xf32, #tpu.memory_space<vmem>>, %arg5: memref<32x32xbf16, #tpu.memory_space<vmem>>, %arg6: memref<1x32xf32, #tpu.memory_space<vmem>>, %arg7: memref<1x32xf32, #tpu.memory_space<vmem>>, %arg8: memref<32x32xbf16, #tpu.memory_space<vmem>>, %arg9: memref<32x32xf32, #tpu.memory_space<vmem>>) attributes {dimension_semantics = [#tpu.dimension_semantics<parallel>, #tpu.dimension_semantics<arbitrary>], iteration_bounds = array<i64: 1, 1>, scalar_prefetch = 0 : i64, scratch_operands = 1 : i64, tpu.core_type = #tpu.core_type<tc>, window_params = [{transform_indices = @transform_0, window_bounds = array<i64: 32, 32>}, {transform_indices = @transform_1, window_bounds = array<i64: 32, 32>}, {pipeline_mode = #tpu.pipeline_mode<synchronous>, transform_indices = @transform_2, window_bounds = array<i64: 1, 32>}, {transform_indices = @transform_3, window_bounds = array<i64: 32, 32>}, {pipeline_mode = #tpu.pipeline_mode<synchronous>, transform_indices = @transform_4, window_bounds = array<i64: 1, 32>}, {pipeline_mode = #tpu.pipeline_mode<synchronous>, transform_indices = @transform_5, window_bounds = array<i64: 1, 32>}, {transform_indices = @transform_6, window_bounds = array<i64: 32, 32>}]} {
    %c0_i32 = arith.constant 0 : i32
    %0 = arith.cmpi eq, %arg1, %c0_i32 : i32
    %1 = arith.extui %0 : i1 to i32
    %c0_i32_0 = arith.constant 0 : i32
    %2 = arith.cmpi ne, %1, %c0_i32_0 : i32
    scf.if %2 {
      %cst_10 = arith.constant 0.000000e+00 : f32
      %12 = vector.broadcast %cst_10 : f32 to vector<32x32xf32>
      %c0_11 = arith.constant 0 : index
      %c0_12 = arith.constant 0 : index
      %13 = vector.load %arg9[%c0_11, %c0_12] : memref<32x32xf32, #tpu.memory_space<vmem>>, vector<32x32xf32>
      tpu.vector_store %arg9[%c0_11, %c0_12], %12 {strides = array<i32>} : memref<32x32xf32, #tpu.memory_space<vmem>>, vector<32x32xf32>,
    } else {
    }
    %c0 = arith.constant 0 : index
    %c0_1 = arith.constant 0 : index
    %3 = vector.load %arg9[%c0, %c0_1] : memref<32x32xf32, #tpu.memory_space<vmem>>, vector<32x32xf32>
    %c0_2 = arith.constant 0 : index
    %c0_3 = arith.constant 0 : index
    %4 = vector.load %arg2[%c0_2, %c0_3] : memref<32x32xbf16, #tpu.memory_space<vmem>>, vector<32x32xbf16>
    %c0_4 = arith.constant 0 : index
    %c0_5 = arith.constant 0 : index
    %5 = vector.load %arg3[%c0_4, %c0_5] : memref<32x32xbf16, #tpu.memory_space<vmem>>, vector<32x32xbf16>
    %cst = arith.constant dense<0.000000e+00> : vector<32x32xf32>
    %6 = tpu.matmul %4, %5, %cst {dimension_numbers = #tpu.dot_dimension_numbers<[1], [0], [0], [1], [0, 0, 1, 1], [], []>} : vector<32x32xbf16>, vector<32x32xbf16>, vector<32x32xf32> -> vector<32x32xf32>
    %7 = arith.addf %3, %6 : vector<32x32xf32>
    %c0_6 = arith.constant 0 : index
    %c0_7 = arith.constant 0 : index
    %8 = vector.load %arg9[%c0_6, %c0_7] : memref<32x32xf32, #tpu.memory_space<vmem>>, vector<32x32xf32>
    tpu.vector_store %arg9[%c0_6, %c0_7], %7 {strides = array<i32>} : memref<32x32xf32, #tpu.memory_space<vmem>>, vector<32x32xf32>,
    %c0_i32_8 = arith.constant 0 : i32
    %9 = arith.cmpi eq, %arg1, %c0_i32_8 : i32
    %10 = arith.extui %9 : i1 to i32
    %c0_i32_9 = arith.constant 0 : i32
    %11 = arith.cmpi ne, %10, %c0_i32_9 : i32
    scf.if %11 {
      %c0_10 = arith.constant 0 : index
      %c0_11 = arith.constant 0 : index
      %12 = vector.load %arg9[%c0_10, %c0_11] : memref<32x32xf32, #tpu.memory_space<vmem>>, vector<32x32xf32>
      %c0_12 = arith.constant 0 : index
      %c0_13 = arith.constant 0 : index
      %13 = vector.load %arg4[%c0_12, %c0_13] : memref<1x32xf32, #tpu.memory_space<vmem>>, vector<1x32xf32>
      %14 = vector.broadcast %13 : vector<1x32xf32> to vector<32x32xf32>
      %15 = arith.addf %12, %14 : vector<32x32xf32>
      %c0_14 = arith.constant 0 : index
      %c0_15 = arith.constant 0 : index
      %16 = vector.load %arg5[%c0_14, %c0_15] : memref<32x32xbf16, #tpu.memory_space<vmem>>, vector<32x32xbf16>
      %17 = arith.extf %16 : vector<32x32xbf16> to vector<32x32xf32>
      %18 = arith.addf %15, %17 : vector<32x32xf32>
      %cst_16 = arith.constant dense<0.000000e+00> : vector<32xf32>
      %19 = vector.multi_reduction <add>, %18, %cst_16 [1] : vector<32x32xf32> to vector<32xf32>
      %20 = vector.shape_cast %19 : vector<32xf32> to vector<32x1xf32>
      %cst_17 = arith.constant 3.200000e+01 : f32
      %21 = vector.broadcast %cst_17 : f32 to vector<32x1xf32>
      %22 = arith.divf %20, %21 : vector<32x1xf32>
      %23 = vector.broadcast %22 : vector<32x1xf32> to vector<32x32xf32>
      %24 = arith.subf %18, %23 : vector<32x32xf32>
      %25 = arith.mulf %24, %24 : vector<32x32xf32>
      %cst_18 = arith.constant dense<0.000000e+00> : vector<32xf32>
      %26 = vector.multi_reduction <add>, %25, %cst_18 [1] : vector<32x32xf32> to vector<32xf32>
      %27 = vector.shape_cast %26 : vector<32xf32> to vector<32x1xf32>
      %cst_19 = arith.constant 3.200000e+01 : f32
      %28 = vector.broadcast %cst_19 : f32 to vector<32x1xf32>
      %29 = arith.divf %27, %28 : vector<32x1xf32>
      %30 = vector.broadcast %22 : vector<32x1xf32> to vector<32x32xf32>
      %31 = arith.subf %18, %30 : vector<32x32xf32>
      %cst_20 = arith.constant 9.99999974E-6 : f32
      %32 = vector.broadcast %cst_20 : f32 to vector<32x1xf32>
      %33 = arith.addf %29, %32 : vector<32x1xf32>
      %34 = math.rsqrt %33 : vector<32x1xf32>
      %35 = vector.broadcast %34 : vector<32x1xf32> to vector<32x32xf32>
      %36 = arith.mulf %31, %35 : vector<32x32xf32>
      %c0_21 = arith.constant 0 : index
      %c0_22 = arith.constant 0 : index
      %37 = vector.load %arg6[%c0_21, %c0_22] : memref<1x32xf32, #tpu.memory_space<vmem>>, vector<1x32xf32>
      %38 = vector.broadcast %37 : vector<1x32xf32> to vector<32x32xf32>
      %39 = arith.mulf %36, %38 : vector<32x32xf32>
      %c0_23 = arith.constant 0 : index
      %c0_24 = arith.constant 0 : index
      %40 = vector.load %arg7[%c0_23, %c0_24] : memref<1x32xf32, #tpu.memory_space<vmem>>, vector<1x32xf32>
      %41 = vector.broadcast %40 : vector<1x32xf32> to vector<32x32xf32>
      %42 = arith.addf %39, %41 : vector<32x32xf32>
      %43 = arith.truncf %42 : vector<32x32xf32> to vector<32x32xbf16>
      %c0_25 = arith.constant 0 : index
      %c0_26 = arith.constant 0 : index
      %44 = vector.load %arg8[%c0_25, %c0_26] : memref<32x32xbf16, #tpu.memory_space<vmem>>, vector<32x32xbf16>
      tpu.vector_store %arg8[%c0_25, %c0_26], %43 {strides = array<i32>} : memref<32x32xbf16, #tpu.memory_space<vmem>>, vector<32x32xbf16>,
    } else {
    }
    return
  }
  func.func @transform_0(%arg0: i32, %arg1: i32) -> (i32, i32) {
    %c0_i32 = arith.constant 0 : i32
    return %arg0, %arg1 : i32, i32
  }
  func.func @transform_1(%arg0: i32, %arg1: i32) -> (i32, i32) {
    %c0_i32 = arith.constant 0 : i32
    %c0_i32_0 = arith.constant 0 : i32
    return %arg1, %c0_i32 : i32, i32
  }
  func.func @transform_2(%arg0: i32, %arg1: i32) -> (i32, i32) {
    %c0_i32 = arith.constant 0 : i32
    %c0_i32_0 = arith.constant 0 : i32
    %c0_i32_1 = arith.constant 0 : i32
    return %c0_i32, %c0_i32_0 : i32, i32
  }
  func.func @transform_3(%arg0: i32, %arg1: i32) -> (i32, i32) {
    %c0_i32 = arith.constant 0 : i32
    %c0_i32_0 = arith.constant 0 : i32
    return %arg0, %c0_i32 : i32, i32
  }
  func.func @transform_4(%arg0: i32, %arg1: i32) -> (i32, i32) {
    %c0_i32 = arith.constant 0 : i32
    %c0_i32_0 = arith.constant 0 : i32
    %c0_i32_1 = arith.constant 0 : i32
    return %c0_i32, %c0_i32_0 : i32, i32
  }
  func.func @transform_5(%arg0: i32, %arg1: i32) -> (i32, i32) {
    %c0_i32 = arith.constant 0 : i32
    %c0_i32_0 = arith.constant 0 : i32
    %c0_i32_1 = arith.constant 0 : i32
    return %c0_i32, %c0_i32_0 : i32, i32
  }
  func.func @transform_6(%arg0: i32, %arg1: i32) -> (i32, i32) {
    %c0_i32 = arith.constant 0 : i32
    %c0_i32_0 = arith.constant 0 : i32
    return %arg0, %c0_i32 : i32, i32
  }
}

module attributes {stable_mosaic.version = 11 : i64} {
  func.func @_attention_kernel(%arg0: i32, %arg1: memref<1x8x96xbf16, #tpu.memory_space<vmem>>, %arg2: memref<1x1x8xf32, #tpu.memory_space<vmem>>, %arg3: memref<1x8x32xbf16, #tpu.memory_space<vmem>>) attributes {dimension_semantics = [#tpu.dimension_semantics<parallel>], iteration_bounds = array<i64: 4>, scalar_prefetch = 0 : i64, scratch_operands = 0 : i64, tpu.core_type = #tpu.core_type<tc>, window_params = [{transform_indices = @transform_0, window_bounds = array<i64: 1, 8, 96>}, {transform_indices = @transform_1, window_bounds = array<i64: 1, 1, 8>}, {transform_indices = @transform_2, window_bounds = array<i64: 1, 8, 32>}]} {
    %c0 = arith.constant 0 : index
    %c0_0 = arith.constant 0 : index
    %c0_1 = arith.constant 0 : index
    %0 = vector.load %arg1[%c0, %c0_0, %c0_1] : memref<1x8x96xbf16, #tpu.memory_space<vmem>>, vector<1x8x96xbf16>
    %1 = vector.shape_cast %0 : vector<1x8x96xbf16> to vector<8x96xbf16>
    %c0_2 = arith.constant 0 : index
    %c0_3 = arith.constant 0 : index
    %c0_4 = arith.constant 0 : index
    %2 = vector.load %arg2[%c0_2, %c0_3, %c0_4] : memref<1x1x8xf32, #tpu.memory_space<vmem>>, vector<1x1x8xf32>
    %3 = vector.shape_cast %2 : vector<1x1x8xf32> to vector<1x8xf32>
    %4 = vector.extract_strided_slice %1 {offsets = [0, 0], sizes = [8, 8], strides = [1, 1]} : vector<8x96xbf16> to vector<8x8xbf16>
    %5 = vector.extract_strided_slice %1 {offsets = [0, 32], sizes = [8, 8], strides = [1, 1]} : vector<8x96xbf16> to vector<8x8xbf16>
    %6 = vector.extract_strided_slice %1 {offsets = [0, 64], sizes = [8, 8], strides = [1, 1]} : vector<8x96xbf16> to vector<8x8xbf16>
    %cst = arith.constant dense<0.000000e+00> : vector<8x8xf32>
    %7 = tpu.matmul %4, %5, %cst {dimension_numbers = #tpu.dot_dimension_numbers<[1], [1], [0], [0], [0, 0, 1, 0], [], []>} : vector<8x8xbf16>, vector<8x8xbf16>, vector<8x8xf32> -> vector<8x8xf32>
    %cst_5 = arith.constant 0.353553385 : f32
    %8 = vector.broadcast %cst_5 : f32 to vector<8x8xf32>
    %9 = arith.mulf %7, %8 : vector<8x8xf32>
    %10 = vector.broadcast %3 : vector<1x8xf32> to vector<8x8xf32>
    %11 = arith.addf %9, %10 : vector<8x8xf32>
    %cst_6 = arith.constant dense<0xFF800000> : vector<8xf32>
    %12 = vector.multi_reduction <maximumf>, %11, %cst_6 [1] : vector<8x8xf32> to vector<8xf32>
    %13 = vector.shape_cast %12 : vector<8xf32> to vector<8x1xf32>
    %14 = vector.broadcast %13 : vector<8x1xf32> to vector<8x8xf32>
    %15 = arith.subf %11, %14 : vector<8x8xf32>
    %16 = math.exp %15 : vector<8x8xf32>
    %cst_7 = arith.constant dense<0.000000e+00> : vector<8xf32>
    %17 = vector.multi_reduction <add>, %16, %cst_7 [1] : vector<8x8xf32> to vector<8xf32>
    %18 = vector.shape_cast %17 : vector<8xf32> to vector<8x1xf32>
    %19 = tpu.reciprocal %18 {approx = true} : vector<8x1xf32> -> vector<8x1xf32>
    %20 = vector.broadcast %19 : vector<8x1xf32> to vector<8x8xf32>
    %21 = arith.mulf %16, %20 : vector<8x8xf32>
    %22 = arith.truncf %21 : vector<8x8xf32> to vector<8x8xbf16>
    %cst_8 = arith.constant dense<0.000000e+00> : vector<8x8xf32>
    %23 = tpu.matmul %22, %6, %cst_8 {dimension_numbers = #tpu.dot_dimension_numbers<[1], [0], [0], [1], [0, 0, 1, 1], [], []>} : vector<8x8xbf16>, vector<8x8xbf16>, vector<8x8xf32> -> vector<8x8xf32>
    %24 = vector.extract_strided_slice %1 {offsets = [0, 8], sizes = [8, 8], strides = [1, 1]} : vector<8x96xbf16> to vector<8x8xbf16>
    %25 = vector.extract_strided_slice %1 {offsets = [0, 40], sizes = [8, 8], strides = [1, 1]} : vector<8x96xbf16> to vector<8x8xbf16>
    %26 = vector.extract_strided_slice %1 {offsets = [0, 72], sizes = [8, 8], strides = [1, 1]} : vector<8x96xbf16> to vector<8x8xbf16>
    %cst_9 = arith.constant dense<0.000000e+00> : vector<8x8xf32>
    %27 = tpu.matmul %24, %25, %cst_9 {dimension_numbers = #tpu.dot_dimension_numbers<[1], [1], [0], [0], [0, 0, 1, 0], [], []>} : vector<8x8xbf16>, vector<8x8xbf16>, vector<8x8xf32> -> vector<8x8xf32>
    %cst_10 = arith.constant 0.353553385 : f32
    %28 = vector.broadcast %cst_10 : f32 to vector<8x8xf32>
    %29 = arith.mulf %27, %28 : vector<8x8xf32>
    %30 = vector.broadcast %3 : vector<1x8xf32> to vector<8x8xf32>
    %31 = arith.addf %29, %30 : vector<8x8xf32>
    %cst_11 = arith.constant dense<0xFF800000> : vector<8xf32>
    %32 = vector.multi_reduction <maximumf>, %31, %cst_11 [1] : vector<8x8xf32> to vector<8xf32>
    %33 = vector.shape_cast %32 : vector<8xf32> to vector<8x1xf32>
    %34 = vector.broadcast %33 : vector<8x1xf32> to vector<8x8xf32>
    %35 = arith.subf %31, %34 : vector<8x8xf32>
    %36 = math.exp %35 : vector<8x8xf32>
    %cst_12 = arith.constant dense<0.000000e+00> : vector<8xf32>
    %37 = vector.multi_reduction <add>, %36, %cst_12 [1] : vector<8x8xf32> to vector<8xf32>
    %38 = vector.shape_cast %37 : vector<8xf32> to vector<8x1xf32>
    %39 = tpu.reciprocal %38 {approx = true} : vector<8x1xf32> -> vector<8x1xf32>
    %40 = vector.broadcast %39 : vector<8x1xf32> to vector<8x8xf32>
    %41 = arith.mulf %36, %40 : vector<8x8xf32>
    %42 = arith.truncf %41 : vector<8x8xf32> to vector<8x8xbf16>
    %cst_13 = arith.constant dense<0.000000e+00> : vector<8x8xf32>
    %43 = tpu.matmul %42, %26, %cst_13 {dimension_numbers = #tpu.dot_dimension_numbers<[1], [0], [0], [1], [0, 0, 1, 1], [], []>} : vector<8x8xbf16>, vector<8x8xbf16>, vector<8x8xf32> -> vector<8x8xf32>
    %44 = vector.extract_strided_slice %1 {offsets = [0, 16], sizes = [8, 8], strides = [1, 1]} : vector<8x96xbf16> to vector<8x8xbf16>
    %45 = vector.extract_strided_slice %1 {offsets = [0, 48], sizes = [8, 8], strides = [1, 1]} : vector<8x96xbf16> to vector<8x8xbf16>
    %46 = vector.extract_strided_slice %1 {offsets = [0, 80], sizes = [8, 8], strides = [1, 1]} : vector<8x96xbf16> to vector<8x8xbf16>
    %cst_14 = arith.constant dense<0.000000e+00> : vector<8x8xf32>
    %47 = tpu.matmul %44, %45, %cst_14 {dimension_numbers = #tpu.dot_dimension_numbers<[1], [1], [0], [0], [0, 0, 1, 0], [], []>} : vector<8x8xbf16>, vector<8x8xbf16>, vector<8x8xf32> -> vector<8x8xf32>
    %cst_15 = arith.constant 0.353553385 : f32
    %48 = vector.broadcast %cst_15 : f32 to vector<8x8xf32>
    %49 = arith.mulf %47, %48 : vector<8x8xf32>
    %50 = vector.broadcast %3 : vector<1x8xf32> to vector<8x8xf32>
    %51 = arith.addf %49, %50 : vector<8x8xf32>
    %cst_16 = arith.constant dense<0xFF800000> : vector<8xf32>
    %52 = vector.multi_reduction <maximumf>, %51, %cst_16 [1] : vector<8x8xf32> to vector<8xf32>
    %53 = vector.shape_cast %52 : vector<8xf32> to vector<8x1xf32>
    %54 = vector.broadcast %53 : vector<8x1xf32> to vector<8x8xf32>
    %55 = arith.subf %51, %54 : vector<8x8xf32>
    %56 = math.exp %55 : vector<8x8xf32>
    %cst_17 = arith.constant dense<0.000000e+00> : vector<8xf32>
    %57 = vector.multi_reduction <add>, %56, %cst_17 [1] : vector<8x8xf32> to vector<8xf32>
    %58 = vector.shape_cast %57 : vector<8xf32> to vector<8x1xf32>
    %59 = tpu.reciprocal %58 {approx = true} : vector<8x1xf32> -> vector<8x1xf32>
    %60 = vector.broadcast %59 : vector<8x1xf32> to vector<8x8xf32>
    %61 = arith.mulf %56, %60 : vector<8x8xf32>
    %62 = arith.truncf %61 : vector<8x8xf32> to vector<8x8xbf16>
    %cst_18 = arith.constant dense<0.000000e+00> : vector<8x8xf32>
    %63 = tpu.matmul %62, %46, %cst_18 {dimension_numbers = #tpu.dot_dimension_numbers<[1], [0], [0], [1], [0, 0, 1, 1], [], []>} : vector<8x8xbf16>, vector<8x8xbf16>, vector<8x8xf32> -> vector<8x8xf32>
    %64 = vector.extract_strided_slice %1 {offsets = [0, 24], sizes = [8, 8], strides = [1, 1]} : vector<8x96xbf16> to vector<8x8xbf16>
    %65 = vector.extract_strided_slice %1 {offsets = [0, 56], sizes = [8, 8], strides = [1, 1]} : vector<8x96xbf16> to vector<8x8xbf16>
    %66 = vector.extract_strided_slice %1 {offsets = [0, 88], sizes = [8, 8], strides = [1, 1]} : vector<8x96xbf16> to vector<8x8xbf16>
    %cst_19 = arith.constant dense<0.000000e+00> : vector<8x8xf32>
    %67 = tpu.matmul %64, %65, %cst_19 {dimension_numbers = #tpu.dot_dimension_numbers<[1], [1], [0], [0], [0, 0, 1, 0], [], []>} : vector<8x8xbf16>, vector<8x8xbf16>, vector<8x8xf32> -> vector<8x8xf32>
    %cst_20 = arith.constant 0.353553385 : f32
    %68 = vector.broadcast %cst_20 : f32 to vector<8x8xf32>
    %69 = arith.mulf %67, %68 : vector<8x8xf32>
    %70 = vector.broadcast %3 : vector<1x8xf32> to vector<8x8xf32>
    %71 = arith.addf %69, %70 : vector<8x8xf32>
    %cst_21 = arith.constant dense<0xFF800000> : vector<8xf32>
    %72 = vector.multi_reduction <maximumf>, %71, %cst_21 [1] : vector<8x8xf32> to vector<8xf32>
    %73 = vector.shape_cast %72 : vector<8xf32> to vector<8x1xf32>
    %74 = vector.broadcast %73 : vector<8x1xf32> to vector<8x8xf32>
    %75 = arith.subf %71, %74 : vector<8x8xf32>
    %76 = math.exp %75 : vector<8x8xf32>
    %cst_22 = arith.constant dense<0.000000e+00> : vector<8xf32>
    %77 = vector.multi_reduction <add>, %76, %cst_22 [1] : vector<8x8xf32> to vector<8xf32>
    %78 = vector.shape_cast %77 : vector<8xf32> to vector<8x1xf32>
    %79 = tpu.reciprocal %78 {approx = true} : vector<8x1xf32> -> vector<8x1xf32>
    %80 = vector.broadcast %79 : vector<8x1xf32> to vector<8x8xf32>
    %81 = arith.mulf %76, %80 : vector<8x8xf32>
    %82 = arith.truncf %81 : vector<8x8xf32> to vector<8x8xbf16>
    %cst_23 = arith.constant dense<0.000000e+00> : vector<8x8xf32>
    %83 = tpu.matmul %82, %66, %cst_23 {dimension_numbers = #tpu.dot_dimension_numbers<[1], [0], [0], [1], [0, 0, 1, 1], [], []>} : vector<8x8xbf16>, vector<8x8xbf16>, vector<8x8xf32> -> vector<8x8xf32>
    %84 = tpu.concatenate %23, %43, %63, %83 in 1 : vector<8x8xf32>, vector<8x8xf32>, vector<8x8xf32>, vector<8x8xf32> -> vector<8x32xf32>
    %85 = arith.truncf %84 : vector<8x32xf32> to vector<8x32xbf16>
    %c0_24 = arith.constant 0 : index
    %c0_25 = arith.constant 0 : index
    %c0_26 = arith.constant 0 : index
    %86 = vector.load %arg3[%c0_24, %c0_25, %c0_26] : memref<1x8x32xbf16, #tpu.memory_space<vmem>>, vector<1x8x32xbf16>
    %87 = vector.shape_cast %86 : vector<1x8x32xbf16> to vector<8x32xbf16>
    %88 = vector.shape_cast %85 : vector<8x32xbf16> to vector<1x8x32xbf16>
    tpu.vector_store %arg3[%c0_24, %c0_25, %c0_26], %88 {strides = array<i32>} : memref<1x8x32xbf16, #tpu.memory_space<vmem>>, vector<1x8x32xbf16>,
    return
  }
  func.func @transform_0(%arg0: i32) -> (i32, i32, i32) {
    %c0_i32 = arith.constant 0 : i32
    %c0_i32_0 = arith.constant 0 : i32
    %c0_i32_1 = arith.constant 0 : i32
    return %arg0, %c0_i32, %c0_i32_0 : i32, i32, i32
  }
  func.func @transform_1(%arg0: i32) -> (i32, i32, i32) {
    %c0_i32 = arith.constant 0 : i32
    %c0_i32_0 = arith.constant 0 : i32
    %c0_i32_1 = arith.constant 0 : i32
    return %arg0, %c0_i32, %c0_i32_0 : i32, i32, i32
  }
  func.func @transform_2(%arg0: i32) -> (i32, i32, i32) {
    %c0_i32 = arith.constant 0 : i32
    %c0_i32_0 = arith.constant 0 : i32
    %c0_i32_1 = arith.constant 0 : i32
    return %arg0, %c0_i32, %c0_i32_0 : i32, i32, i32
  }
}

module attributes {stable_mosaic.version = 11 : i64} {
  func.func @_matmul_kernel(%arg0: i32, %arg1: i32, %arg2: i32, %arg3: memref<32x32xbf16, #tpu.memory_space<vmem>>, %arg4: memref<32x64xbf16, #tpu.memory_space<vmem>>, %arg5: memref<1x64xf32, #tpu.memory_space<vmem>>, %arg6: memref<32x64xbf16, #tpu.memory_space<vmem>>, %arg7: memref<32x64xf32, #tpu.memory_space<vmem>>) attributes {dimension_semantics = [#tpu.dimension_semantics<parallel>, #tpu.dimension_semantics<parallel>, #tpu.dimension_semantics<arbitrary>], iteration_bounds = array<i64: 1, 1, 1>, scalar_prefetch = 0 : i64, scratch_operands = 1 : i64, tpu.core_type = #tpu.core_type<tc>, window_params = [{transform_indices = @transform_0, window_bounds = array<i64: 32, 32>}, {transform_indices = @transform_1, window_bounds = array<i64: 32, 64>}, {transform_indices = @transform_2, window_bounds = array<i64: 1, 64>}, {transform_indices = @transform_3, window_bounds = array<i64: 32, 64>}]} {
    %c0_i32 = arith.constant 0 : i32
    %0 = arith.cmpi eq, %arg2, %c0_i32 : i32
    %1 = arith.extui %0 : i1 to i32
    %c0_i32_0 = arith.constant 0 : i32
    %2 = arith.cmpi ne, %1, %c0_i32_0 : i32
    scf.if %2 {
      %cst_10 = arith.constant 0.000000e+00 : f32
      %12 = vector.broadcast %cst_10 : f32 to vector<32x64xf32>
      %c0_11 = arith.constant 0 : index
      %c0_12 = arith.constant 0 : index
      %13 = vector.load %arg7[%c0_11, %c0_12] : memref<32x64xf32, #tpu.memory_space<vmem>>, vector<32x64xf32>
      tpu.vector_store %arg7[%c0_11, %c0_12], %12 {strides = array<i32>} : memref<32x64xf32, #tpu.memory_space<vmem>>, vector<32x64xf32>,
    } else {
    }
    %c0 = arith.constant 0 : index
    %c0_1 = arith.constant 0 : index
    %3 = vector.load %arg7[%c0, %c0_1] : memref<32x64xf32, #tpu.memory_space<vmem>>, vector<32x64xf32>
    %c0_2 = arith.constant 0 : index
    %c0_3 = arith.constant 0 : index
    %4 = vector.load %arg3[%c0_2, %c0_3] : memref<32x32xbf16, #tpu.memory_space<vmem>>, vector<32x32xbf16>
    %c0_4 = arith.constant 0 : index
    %c0_5 = arith.constant 0 : index
    %5 = vector.load %arg4[%c0_4, %c0_5] : memref<32x64xbf16, #tpu.memory_space<vmem>>, vector<32x64xbf16>
    %cst = arith.constant dense<0.000000e+00> : vector<32x64xf32>
    %6 = tpu.matmul %4, %5, %cst {dimension_numbers = #tpu.dot_dimension_numbers<[1], [0], [0], [1], [0, 0, 1, 1], [], []>} : vector<32x32xbf16>, vector<32x64xbf16>, vector<32x64xf32> -> vector<32x64xf32>
    %7 = arith.addf %3, %6 : vector<32x64xf32>
    %c0_6 = arith.constant 0 : index
    %c0_7 = arith.constant 0 : index
    %8 = vector.load %arg7[%c0_6, %c0_7] : memref<32x64xf32, #tpu.memory_space<vmem>>, vector<32x64xf32>
    tpu.vector_store %arg7[%c0_6, %c0_7], %7 {strides = array<i32>} : memref<32x64xf32, #tpu.memory_space<vmem>>, vector<32x64xf32>,
    %c0_i32_8 = arith.constant 0 : i32
    %9 = arith.cmpi eq, %arg2, %c0_i32_8 : i32
    %10 = arith.extui %9 : i1 to i32
    %c0_i32_9 = arith.constant 0 : i32
    %11 = arith.cmpi ne, %10, %c0_i32_9 : i32
    scf.if %11 {
      %c0_10 = arith.constant 0 : index
      %c0_11 = arith.constant 0 : index
      %12 = vector.load %arg7[%c0_10, %c0_11] : memref<32x64xf32, #tpu.memory_space<vmem>>, vector<32x64xf32>
      %c0_12 = arith.constant 0 : index
      %c0_13 = arith.constant 0 : index
      %13 = vector.load %arg5[%c0_12, %c0_13] : memref<1x64xf32, #tpu.memory_space<vmem>>, vector<1x64xf32>
      %14 = vector.broadcast %13 : vector<1x64xf32> to vector<32x64xf32>
      %15 = arith.addf %12, %14 : vector<32x64xf32>
      %16 = arith.mulf %15, %15 : vector<32x64xf32>
      %17 = arith.mulf %15, %16 : vector<32x64xf32>
      %cst_14 = arith.constant 4.471500e-02 : f32
      %18 = vector.broadcast %cst_14 : f32 to vector<32x64xf32>
      %19 = arith.mulf %18, %17 : vector<32x64xf32>
      %20 = arith.addf %15, %19 : vector<32x64xf32>
      %cst_15 = arith.constant 0.797884583 : f32
      %21 = vector.broadcast %cst_15 : f32 to vector<32x64xf32>
      %22 = arith.mulf %21, %20 : vector<32x64xf32>
      %23 = math.tanh %22 : vector<32x64xf32>
      %cst_16 = arith.constant 1.000000e+00 : f32
      %24 = vector.broadcast %cst_16 : f32 to vector<32x64xf32>
      %25 = arith.addf %24, %23 : vector<32x64xf32>
      %cst_17 = arith.constant 5.000000e-01 : f32
      %26 = vector.broadcast %cst_17 : f32 to vector<32x64xf32>
      %27 = arith.mulf %26, %25 : vector<32x64xf32>
      %28 = arith.mulf %15, %27 : vector<32x64xf32>
      %29 = arith.truncf %28 : vector<32x64xf32> to vector<32x64xbf16>
      %c0_18 = arith.constant 0 : index
      %c0_19 = arith.constant 0 : index
      %30 = vector.load %arg6[%c0_18, %c0_19] : memref<32x64xbf16, #tpu.memory_space<vmem>>, vector<32x64xbf16>
      tpu.vector_store %arg6[%c0_18, %c0_19], %29 {strides = array<i32>} : memref<32x64xbf16, #tpu.memory_space<vmem>>, vector<32x64xbf16>,
    } else {
    }
    return
  }
  func.func @transform_0(%arg0: i32, %arg1: i32, %arg2: i32) -> (i32, i32) {
    %c0_i32 = arith.constant 0 : i32
    return %arg0, %arg2 : i32, i32
  }
  func.func @transform_1(%arg0: i32, %arg1: i32, %arg2: i32) -> (i32, i32) {
    %c0_i32 = arith.constant 0 : i32
    return %arg2, %arg1 : i32, i32
  }
  func.func @transform_2(%arg0: i32, %arg1: i32, %arg2: i32) -> (i32, i32) {
    %c0_i32 = arith.constant 0 : i32
    %c0_i32_0 = arith.constant 0 : i32
    return %c0_i32, %arg1 : i32, i32
  }
  func.func @transform_3(%arg0: i32, %arg1: i32, %arg2: i32) -> (i32, i32) {
    %c0_i32 = arith.constant 0 : i32
    return %arg0, %arg1 : i32, i32
  }
}

module attributes {stable_mosaic.version = 11 : i64} {
  func.func @_matmul_res_ln_kernel(%arg0: i32, %arg1: i32, %arg2: memref<32x64xbf16, #tpu.memory_space<vmem>>, %arg3: memref<64x32xbf16, #tpu.memory_space<vmem>>, %arg4: memref<1x32xf32, #tpu.memory_space<vmem>>, %arg5: memref<32x32xbf16, #tpu.memory_space<vmem>>, %arg6: memref<1x32xf32, #tpu.memory_space<vmem>>, %arg7: memref<1x32xf32, #tpu.memory_space<vmem>>, %arg8: memref<32x32xbf16, #tpu.memory_space<vmem>>, %arg9: memref<32x32xf32, #tpu.memory_space<vmem>>) attributes {dimension_semantics = [#tpu.dimension_semantics<parallel>, #tpu.dimension_semantics<arbitrary>], iteration_bounds = array<i64: 1, 1>, scalar_prefetch = 0 : i64, scratch_operands = 1 : i64, tpu.core_type = #tpu.core_type<tc>, window_params = [{transform_indices = @transform_0, window_bounds = array<i64: 32, 64>}, {transform_indices = @transform_1, window_bounds = array<i64: 64, 32>}, {pipeline_mode = #tpu.pipeline_mode<synchronous>, transform_indices = @transform_2, window_bounds = array<i64: 1, 32>}, {transform_indices = @transform_3, window_bounds = array<i64: 32, 32>}, {pipeline_mode = #tpu.pipeline_mode<synchronous>, transform_indices = @transform_4, window_bounds = array<i64: 1, 32>}, {pipeline_mode = #tpu.pipeline_mode<synchronous>, transform_indices = @transform_5, window_bounds = array<i64: 1, 32>}, {transform_indices = @transform_6, window_bounds = array<i64: 32, 32>}]} {
    %c0_i32 = arith.constant 0 : i32
    %0 = arith.cmpi eq, %arg1, %c0_i32 : i32
    %1 = arith.extui %0 : i1 to i32
    %c0_i32_0 = arith.constant 0 : i32
    %2 = arith.cmpi ne, %1, %c0_i32_0 : i32
    scf.if %2 {
      %cst_10 = arith.constant 0.000000e+00 : f32
      %12 = vector.broadcast %cst_10 : f32 to vector<32x32xf32>
      %c0_11 = arith.constant 0 : index
      %c0_12 = arith.constant 0 : index
      %13 = vector.load %arg9[%c0_11, %c0_12] : memref<32x32xf32, #tpu.memory_space<vmem>>, vector<32x32xf32>
      tpu.vector_store %arg9[%c0_11, %c0_12], %12 {strides = array<i32>} : memref<32x32xf32, #tpu.memory_space<vmem>>, vector<32x32xf32>,
    } else {
    }
    %c0 = arith.constant 0 : index
    %c0_1 = arith.constant 0 : index
    %3 = vector.load %arg9[%c0, %c0_1] : memref<32x32xf32, #tpu.memory_space<vmem>>, vector<32x32xf32>
    %c0_2 = arith.constant 0 : index
    %c0_3 = arith.constant 0 : index
    %4 = vector.load %arg2[%c0_2, %c0_3] : memref<32x64xbf16, #tpu.memory_space<vmem>>, vector<32x64xbf16>
    %c0_4 = arith.constant 0 : index
    %c0_5 = arith.constant 0 : index
    %5 = vector.load %arg3[%c0_4, %c0_5] : memref<64x32xbf16, #tpu.memory_space<vmem>>, vector<64x32xbf16>
    %cst = arith.constant dense<0.000000e+00> : vector<32x32xf32>
    %6 = tpu.matmul %4, %5, %cst {dimension_numbers = #tpu.dot_dimension_numbers<[1], [0], [0], [1], [0, 0, 1, 1], [], []>} : vector<32x64xbf16>, vector<64x32xbf16>, vector<32x32xf32> -> vector<32x32xf32>
    %7 = arith.addf %3, %6 : vector<32x32xf32>
    %c0_6 = arith.constant 0 : index
    %c0_7 = arith.constant 0 : index
    %8 = vector.load %arg9[%c0_6, %c0_7] : memref<32x32xf32, #tpu.memory_space<vmem>>, vector<32x32xf32>
    tpu.vector_store %arg9[%c0_6, %c0_7], %7 {strides = array<i32>} : memref<32x32xf32, #tpu.memory_space<vmem>>, vector<32x32xf32>,
    %c0_i32_8 = arith.constant 0 : i32
    %9 = arith.cmpi eq, %arg1, %c0_i32_8 : i32
    %10 = arith.extui %9 : i1 to i32
    %c0_i32_9 = arith.constant 0 : i32
    %11 = arith.cmpi ne, %10, %c0_i32_9 : i32
    scf.if %11 {
      %c0_10 = arith.constant 0 : index
      %c0_11 = arith.constant 0 : index
      %12 = vector.load %arg9[%c0_10, %c0_11] : memref<32x32xf32, #tpu.memory_space<vmem>>, vector<32x32xf32>
      %c0_12 = arith.constant 0 : index
      %c0_13 = arith.constant 0 : index
      %13 = vector.load %arg4[%c0_12, %c0_13] : memref<1x32xf32, #tpu.memory_space<vmem>>, vector<1x32xf32>
      %14 = vector.broadcast %13 : vector<1x32xf32> to vector<32x32xf32>
      %15 = arith.addf %12, %14 : vector<32x32xf32>
      %c0_14 = arith.constant 0 : index
      %c0_15 = arith.constant 0 : index
      %16 = vector.load %arg5[%c0_14, %c0_15] : memref<32x32xbf16, #tpu.memory_space<vmem>>, vector<32x32xbf16>
      %17 = arith.extf %16 : vector<32x32xbf16> to vector<32x32xf32>
      %18 = arith.addf %15, %17 : vector<32x32xf32>
      %cst_16 = arith.constant dense<0.000000e+00> : vector<32xf32>
      %19 = vector.multi_reduction <add>, %18, %cst_16 [1] : vector<32x32xf32> to vector<32xf32>
      %20 = vector.shape_cast %19 : vector<32xf32> to vector<32x1xf32>
      %cst_17 = arith.constant 3.200000e+01 : f32
      %21 = vector.broadcast %cst_17 : f32 to vector<32x1xf32>
      %22 = arith.divf %20, %21 : vector<32x1xf32>
      %23 = vector.broadcast %22 : vector<32x1xf32> to vector<32x32xf32>
      %24 = arith.subf %18, %23 : vector<32x32xf32>
      %25 = arith.mulf %24, %24 : vector<32x32xf32>
      %cst_18 = arith.constant dense<0.000000e+00> : vector<32xf32>
      %26 = vector.multi_reduction <add>, %25, %cst_18 [1] : vector<32x32xf32> to vector<32xf32>
      %27 = vector.shape_cast %26 : vector<32xf32> to vector<32x1xf32>
      %cst_19 = arith.constant 3.200000e+01 : f32
      %28 = vector.broadcast %cst_19 : f32 to vector<32x1xf32>
      %29 = arith.divf %27, %28 : vector<32x1xf32>
      %30 = vector.broadcast %22 : vector<32x1xf32> to vector<32x32xf32>
      %31 = arith.subf %18, %30 : vector<32x32xf32>
      %cst_20 = arith.constant 9.99999974E-6 : f32
      %32 = vector.broadcast %cst_20 : f32 to vector<32x1xf32>
      %33 = arith.addf %29, %32 : vector<32x1xf32>
      %34 = math.rsqrt %33 : vector<32x1xf32>
      %35 = vector.broadcast %34 : vector<32x1xf32> to vector<32x32xf32>
      %36 = arith.mulf %31, %35 : vector<32x32xf32>
      %c0_21 = arith.constant 0 : index
      %c0_22 = arith.constant 0 : index
      %37 = vector.load %arg6[%c0_21, %c0_22] : memref<1x32xf32, #tpu.memory_space<vmem>>, vector<1x32xf32>
      %38 = vector.broadcast %37 : vector<1x32xf32> to vector<32x32xf32>
      %39 = arith.mulf %36, %38 : vector<32x32xf32>
      %c0_23 = arith.constant 0 : index
      %c0_24 = arith.constant 0 : index
      %40 = vector.load %arg7[%c0_23, %c0_24] : memref<1x32xf32, #tpu.memory_space<vmem>>, vector<1x32xf32>
      %41 = vector.broadcast %40 : vector<1x32xf32> to vector<32x32xf32>
      %42 = arith.addf %39, %41 : vector<32x32xf32>
      %43 = arith.truncf %42 : vector<32x32xf32> to vector<32x32xbf16>
      %c0_25 = arith.constant 0 : index
      %c0_26 = arith.constant 0 : index
      %44 = vector.load %arg8[%c0_25, %c0_26] : memref<32x32xbf16, #tpu.memory_space<vmem>>, vector<32x32xbf16>
      tpu.vector_store %arg8[%c0_25, %c0_26], %43 {strides = array<i32>} : memref<32x32xbf16, #tpu.memory_space<vmem>>, vector<32x32xbf16>,
    } else {
    }
    return
  }
  func.func @transform_0(%arg0: i32, %arg1: i32) -> (i32, i32) {
    %c0_i32 = arith.constant 0 : i32
    return %arg0, %arg1 : i32, i32
  }
  func.func @transform_1(%arg0: i32, %arg1: i32) -> (i32, i32) {
    %c0_i32 = arith.constant 0 : i32
    %c0_i32_0 = arith.constant 0 : i32
    return %arg1, %c0_i32 : i32, i32
  }
  func.func @transform_2(%arg0: i32, %arg1: i32) -> (i32, i32) {
    %c0_i32 = arith.constant 0 : i32
    %c0_i32_0 = arith.constant 0 : i32
    %c0_i32_1 = arith.constant 0 : i32
    return %c0_i32, %c0_i32_0 : i32, i32
  }
  func.func @transform_3(%arg0: i32, %arg1: i32) -> (i32, i32) {
    %c0_i32 = arith.constant 0 : i32
    %c0_i32_0 = arith.constant 0 : i32
    return %arg0, %c0_i32 : i32, i32
  }
  func.func @transform_4(%arg0: i32, %arg1: i32) -> (i32, i32) {
    %c0_i32 = arith.constant 0 : i32
    %c0_i32_0 = arith.constant 0 : i32
    %c0_i32_1 = arith.constant 0 : i32
    return %c0_i32, %c0_i32_0 : i32, i32
  }
  func.func @transform_5(%arg0: i32, %arg1: i32) -> (i32, i32) {
    %c0_i32 = arith.constant 0 : i32
    %c0_i32_0 = arith.constant 0 : i32
    %c0_i32_1 = arith.constant 0 : i32
    return %c0_i32, %c0_i32_0 : i32, i32
  }
  func.func @transform_6(%arg0: i32, %arg1: i32) -> (i32, i32) {
    %c0_i32 = arith.constant 0 : i32
    %c0_i32_0 = arith.constant 0 : i32
    return %arg0, %c0_i32 : i32, i32
  }
}

</mosaic_0001>

<llo_original>
// kernel: roberta_sim_forward.11
$region0: #{roberta_sim_forward.11}
  #allocation0 [shape = 'u32[]', space=smem, size = 0x4, offset = 0x4, fixed_abs, tag = 'smem constant byte address 0x4 - core index']
  #allocation1 [shape = 'u32[72,128]{1,0:T(1,128)}', space=vmem, size = 0x9000, scoped, tag = 'internal scratch']
  %s0 = inlined_call_operand.vmem [shape: f32[32,32], index: 0, kind: input, shape index: {}]
  %s1 = inlined_call_operand.vmem [shape: f32[1,32], index: 1, kind: input, shape index: {}]
  %s2 = inlined_call_operand.vmem [shape: f32[1,32], index: 2, kind: input, shape index: {}]
  %s3 = inlined_call_operand.vmem [shape: bf16[32,32], index: 3, kind: output, shape index: {}]
  %s4 = sld [smem:[#allocation0]]
  $region22: #{roberta_sim_forward.11} parent=0
    _
  %s6 = ssub.s32 1, %s4
  %s7 = scalar_select 0, %s6, %s4
  // Predicated region
  $region2: #{roberta_sim_forward.11} parent=0 // pred_check
    _
  $region3: #{roberta_sim_forward.11} parent=0 // pred_check_branch
    %9 = sbr.rel (0) target = $region5
  $region4: #{roberta_sim_forward.11} parent=0 // pred_region
    _
  $region5: #{roberta_sim_forward.11} parent=0 // pred_fallthru
    _
  // Predicated region
  $region6: #{roberta_sim_forward.11} parent=0 // pred_check
    _
  $region7: #{roberta_sim_forward.11} parent=0 // pred_check_branch
    %11 = sbr.rel (0) target = $region9
  $region8: #{roberta_sim_forward.11} parent=0 // pred_region
    _
  $region9: #{roberta_sim_forward.11} parent=0 // pred_fallthru
    _
  // Predicated region
  $region10: #{roberta_sim_forward.11} parent=0 // pred_check
    _
  $region11: #{roberta_sim_forward.11} parent=0 // pred_check_branch
    %13 = sbr.rel (0) target = $region13
  $region12: #{roberta_sim_forward.11} parent=0 // pred_region
    _
  $region13: #{roberta_sim_forward.11} parent=0 // pred_fallthru
    _
  %v14 = vld [vmem:[%s0] sm:$0xff]
  %v15 = vld [vmem:[%s0 + $0x8] sm:$0xff]
  %v16 = vld [vmem:[%s0 + $0x10] sm:$0xff]
  %v17 = vld [vmem:[%s0 + $0x18] sm:$0xff]
  %vm18 = vcmask 261120
  %v19 = vsel %vm18, %v14, 0.0
  %20 = vadd.xlane.f32.xlu0 %v19
  %v21 = vpop.xlane.xlu0 %20
  %v22 = vsel %vm18, %v15, 0.0
  %23 = vadd.xlane.f32.xlu0 %v22
  %v24 = vpop.xlane.xlu0 %23
  %v25 = vsel %vm18, %v16, 0.0
  %26 = vadd.xlane.f32.xlu0 %v25
  %v27 = vpop.xlane.xlu0 %26
  %v28 = vsel %vm18, %v17, 0.0
  %29 = vadd.xlane.f32.xlu0 %v28
  %v30 = vpop.xlane.xlu0 %29
  %v31 = vrcp.pop 32.0
  %v32 = vmul.f32 32.0, %v31
  %v33 = vsub.f32 1.0, %v32
  %v34 = vmul.f32 %v31, %v33
  %v35 = vadd.f32 %v31, %v34
  %vm36 = vweird.f32 %v31
  %v37 = vsel %vm36, %v31, %v35
  %v38 = vmul.f32 %v21, %v37
  %v39 = vmul.f32 %v24, %v37
  %v40 = vmul.f32 %v27, %v37
  %v41 = vmul.f32 %v30, %v37
  %v42 = vsub.f32 %v14, %v38
  %v43 = vsub.f32 %v15, %v39
  %v44 = vsub.f32 %v16, %v40
  %v45 = vsub.f32 %v17, %v41
  %v46 = vmul.f32 %v42, %v42
  %v47 = vmul.f32 %v43, %v43
  %v48 = vmul.f32 %v44, %v44
  %v49 = vmul.f32 %v45, %v45
  %v50 = vsel %vm18, %v46, 0.0
  %51 = vadd.xlane.f32.xlu0 %v50
  %v52 = vpop.xlane.xlu0 %51
  %v53 = vsel %vm18, %v47, 0.0
  %54 = vadd.xlane.f32.xlu0 %v53
  %v55 = vpop.xlane.xlu0 %54
  %v56 = vsel %vm18, %v48, 0.0
  %57 = vadd.xlane.f32.xlu0 %v56
  %v58 = vpop.xlane.xlu0 %57
  %v59 = vsel %vm18, %v49, 0.0
  %60 = vadd.xlane.f32.xlu0 %v59
  %v61 = vpop.xlane.xlu0 %60
  %v62 = vmul.f32 %v52, %v37
  %v63 = vmul.f32 %v55, %v37
  %v64 = vmul.f32 %v58, %v37
  %v65 = vmul.f32 %v61, %v37
  %v66 = vadd.f32 %v62, 1e-05
  %v67 = vadd.f32 %v63, 1e-05
  %v68 = vadd.f32 %v64, 1e-05
  %v69 = vadd.f32 %v65, 1e-05
  %v70 = vrsqrt.pop %v66
  %v71 = vmul.f32 %v70, %v66
  %v72 = vmul.f32 %v71, %v70
  %v73 = vmul.f32 0.5, %v72
  %v74 = vsub.f32 1.5, %v73
  %v75 = vmul.f32 %v70, %v74
  %vm76 = vweird.f32 %v66
  %vm77 = vweird.f32 %v70
  %vm78 = vmor %vm76, %vm77
  %v79 = vsel %vm78, %v70, %v75
  %v80 = vrsqrt.pop %v67
  %v81 = vmul.f32 %v80, %v67
  %v82 = vmul.f32 %v81, %v80
  %v83 = vmul.f32 0.5, %v82
  %v84 = vsub.f32 1.5, %v83
  %v85 = vmul.f32 %v80, %v84
  %vm86 = vweird.f32 %v67
  %vm87 = vweird.f32 %v80
  %vm88 = vmor %vm86, %vm87
  %v89 = vsel %vm88, %v80, %v85
  %v90 = vrsqrt.pop %v68
  %v91 = vmul.f32 %v90, %v68
  %v92 = vmul.f32 %v91, %v90
  %v93 = vmul.f32 0.5, %v92
  %v94 = vsub.f32 1.5, %v93
  %v95 = vmul.f32 %v90, %v94
  %vm96 = vweird.f32 %v68
  %vm97 = vweird.f32 %v90
  %vm98 = vmor %vm96, %vm97
  %v99 = vsel %vm98, %v90, %v95
  %v100 = vrsqrt.pop %v69
  %v101 = vmul.f32 %v100, %v69
  %v102 = vmul.f32 %v101, %v100
  %v103 = vmul.f32 0.5, %v102
  %v104 = vsub.f32 1.5, %v103
  %v105 = vmul.f32 %v100, %v104
  %vm106 = vweird.f32 %v69
  %vm107 = vweird.f32 %v100
  %vm108 = vmor %vm106, %vm107
  %v109 = vsel %vm108, %v100, %v105
  %v110 = vmul.f32 %v42, %v79
  %v111 = vmul.f32 %v43, %v89
  %v112 = vmul.f32 %v44, %v99
  %v113 = vmul.f32 %v45, %v109
  %v114 = vld [vmem:[%s1] sm:$0x1]
  %v116 = vperm.slane %v114, 0
  %v118 = vmul.f32 %v110, %v116
  %v119 = vmul.f32 %v111, %v116
  %v120 = vmul.f32 %v112, %v116
  %v121 = vmul.f32 %v113, %v116
  %v122 = vld [vmem:[%s2] sm:$0x1]
  %v124 = vperm.slane %v122, 0
  %v126 = vadd.f32 %v118, %v124
  %v127 = vadd.f32 %v119, %v124
  %v128 = vadd.f32 %v120, %v124
  %v129 = vadd.f32 %v121, %v124
  %v130 = vpack.c.bf16 %v126, %v126
  %v131 = vpack.c.bf16 %v127, %v127
  %v132 = vpack.c.bf16 %v128, %v128
  %v133 = vpack.c.bf16 %v129, %v129
  %vm134 = vcmask 257024
  %135 = vst.msk [vmem:[%s3] sm:$0xf] %vm134, %v130
  %136 = vst.msk [vmem:[%s3 + $0x4] sm:$0xf] %vm134, %v131
  %137 = vst.msk [vmem:[%s3 + $0x8] sm:$0xf] %vm134, %v132
  %138 = vst.msk [vmem:[%s3 + $0xc] sm:$0xf] %vm134, %v133
  // Predicated region
  $region14: #{roberta_sim_forward.11} parent=0 // pred_check
    _
  $region15: #{roberta_sim_forward.11} parent=0 // pred_check_branch
    %140 = sbr.rel (0) target = $region17
  $region16: #{roberta_sim_forward.11} parent=0 // pred_region
    _
  $region17: #{roberta_sim_forward.11} parent=0 // pred_fallthru
    _
  // Predicated region
  $region18: #{roberta_sim_forward.11} parent=0 // pred_check
    _
  $region19: #{roberta_sim_forward.11} parent=0 // pred_check_branch
    %142 = sbr.rel (0) target = $region21
  $region20: #{roberta_sim_forward.11} parent=0 // pred_region
    _
  $region21: #{roberta_sim_forward.11} parent=0 // pred_fallthru
    _

// kernel: roberta_sim_forward.12
$region0: #{roberta_sim_forward.12}
  #allocation0 [shape = 'u32[]', space=smem, size = 0x4, offset = 0x4, fixed_abs, tag = 'smem constant byte address 0x4 - core index']
  #allocation1 [shape = 'u32[72,128]{1,0:T(1,128)}', space=vmem, size = 0x9000, scoped, tag = 'internal scratch']
  #allocation2 [shape = 'f32[32,96]{1,0:T(8,128)}', space=vmem, size = 0x4000, scoped, tag = 'scratch operand']
  %s0 = inlined_call_operand.vmem [shape: bf16[32,32], index: 0, kind: input, shape index: {}]
  %s1 = inlined_call_operand.vmem [shape: bf16[32,96], index: 1, kind: input, shape index: {}]
  %s2 = inlined_call_operand.vmem [shape: f32[1,96], index: 2, kind: input, shape index: {}]
  %s3 = inlined_call_operand.vmem [shape: bf16[32,96], index: 3, kind: output, shape index: {}]
  %s4 = sld [smem:[#allocation0]]
  $region30: #{roberta_sim_forward.12} parent=0
    _
  %s6 = ssub.s32 1, %s4
  %s7 = scalar_select 0, %s6, %s4
  // Predicated region
  $region2: #{roberta_sim_forward.12} parent=0 // pred_check
    _
  $region3: #{roberta_sim_forward.12} parent=0 // pred_check_branch
    %9 = sbr.rel (0) target = $region5
  $region4: #{roberta_sim_forward.12} parent=0 // pred_region
    _
  $region5: #{roberta_sim_forward.12} parent=0 // pred_fallthru
    _
  // Predicated region
  $region6: #{roberta_sim_forward.12} parent=0 // pred_check
    _
  $region7: #{roberta_sim_forward.12} parent=0 // pred_check_branch
    %11 = sbr.rel (0) target = $region9
  $region8: #{roberta_sim_forward.12} parent=0 // pred_region
    _
  $region9: #{roberta_sim_forward.12} parent=0 // pred_fallthru
    _
  // Predicated region
  $region10: #{roberta_sim_forward.12} parent=0 // pred_check
    _
  $region11: #{roberta_sim_forward.12} parent=0 // pred_check_branch
    %13 = sbr.rel (0) target = $region13
  $region12: #{roberta_sim_forward.12} parent=0 // pred_region
    _
  $region13: #{roberta_sim_forward.12} parent=0 // pred_fallthru
    _
  %p15 = scmp.eq.s32.totalorder 0, 0
  // Predicated region
  $region14: #{roberta_sim_forward.12} parent=0 // pred_check
    %p16 = pneg %p15
  $region15: #{roberta_sim_forward.12} parent=0 // pred_check_branch
    %18 = sbr.rel (%p16) target = $region17
  $region16: #{roberta_sim_forward.12} parent=0 // pred_region
    %vm19 = vcmask 785408
    %20 = vst.msk [vmem:[#allocation2] sm:$0xff] %vm19, 0.0
    %21 = vst.msk [vmem:[#allocation2 + $0x8] sm:$0xff] %vm19, 0.0
    %22 = vst.msk [vmem:[#allocation2 + $0x10] sm:$0xff] %vm19, 0.0
    %23 = vst.msk [vmem:[#allocation2 + $0x18] sm:$0xff] %vm19, 0.0
  $region17: #{roberta_sim_forward.12} parent=0 // pred_fallthru
    _
  %v24 = vld [vmem:[#allocation2] sm:$0xff]
  %v25 = vld [vmem:[#allocation2 + $0x8] sm:$0xff]
  %v26 = vld [vmem:[#allocation2 + $0x10] sm:$0xff]
  %v27 = vld [vmem:[#allocation2 + $0x18] sm:$0xff]
  %v28 = vld [vmem:[%s0] sm:$0xf]
  %v29 = vld [vmem:[%s0 + $0x4] sm:$0xf]
  %v30 = vld [vmem:[%s0 + $0x8] sm:$0xf]
  %v31 = vld [vmem:[%s0 + $0xc] sm:$0xf]
  %v32 = vld [vmem:[%s1] sm:$0xf]
  %v33 = vld [vmem:[%s1 + $0x4] sm:$0xf]
  %v34 = vld [vmem:[%s1 + $0x8] sm:$0xf]
  %v35 = vld [vmem:[%s1 + $0xc] sm:$0xf]
  %v40 = vunpack.c.l.b16 %v28
  %v41 = vunpack.c.l.b16 %v29
  %v42 = vunpack.c.l.b16 %v30
  %v43 = vunpack.c.l.b16 %v31
  %v44 = vpack.c.b16 %v41, %v40
  %v45 = vpack.c.b16 %v43, %v42
  %v50 = vunpack.c.l.b16 %v32
  %v51 = vunpack.c.l.b16 %v33
  %v52 = vunpack.c.l.b16 %v34
  %v53 = vunpack.c.l.b16 %v35
  %v54 = vpack.c.b16 %v51, %v50
  %v55 = vpack.c.b16 %v53, %v52
  %vm58 = vcmask 261120
  %v60 = vsel %vm58, %v44, 0
  %v63 = vsel %vm58, %v45, 0
  %65 = vmatpush.bf16.msra.mxu0 0
  %66 = vmatpush.bf16.msra.mxu0 0
  %67 = vmatpush.bf16.msra.mxu0 0
  %68 = vmatpush.bf16.msra.mxu0 0
  %69 = vmatpush.bf16.msra.mxu0 0
  %70 = vmatpush.bf16.msra.mxu0 0
  %71 = vmatpush.bf16.msra.mxu0 %v55
  %72 = vmatpush.bf16.msra.mxu0 %v54
  %73 = vmatmul.bf16.gmra.mxu0 %v60
  %v74 = vpop.f32.mrf.mxu0
  %v75 = vadd.f32 0.0, %v74
  %v76 = vpop.f32.mrf.mxu0
  %v77 = vadd.f32 0.0, %v76
  %78 = vmatmul.bf16.gmra.mxu0 %v63
  %v79 = vpop.f32.mrf.mxu0
  %v80 = vadd.f32 0.0, %v79
  %v81 = vpop.f32.mrf.mxu0
  %v82 = vadd.f32 0.0, %v81
  %83 = vdwg.mxu0
  %v84 = vadd.f32 %v24, %v75
  %v85 = vadd.f32 %v25, %v77
  %v86 = vadd.f32 %v26, %v80
  %v87 = vadd.f32 %v27, %v82
  %vm88 = vcmask 785408
  %89 = vst.msk [vmem:[#allocation2] sm:$0xff] %vm88, %v84
  %90 = vst.msk [vmem:[#allocation2 + $0x8] sm:$0xff] %vm88, %v85
  %91 = vst.msk [vmem:[#allocation2 + $0x10] sm:$0xff] %vm88, %v86
  %92 = vst.msk [vmem:[#allocation2 + $0x18] sm:$0xff] %vm88, %v87
  // Predicated region
  $region18: #{roberta_sim_forward.12} parent=0 // pred_check
    %p93 = pneg %p15
  $region19: #{roberta_sim_forward.12} parent=0 // pred_check_branch
    %95 = sbr.rel (%p93) target = $region21
  $region20: #{roberta_sim_forward.12} parent=0 // pred_region
    %v96 = vld [vmem:[#allocation2] sm:$0xff]
    %v97 = vld [vmem:[#allocation2 + $0x8] sm:$0xff]
    %v98 = vld [vmem:[#allocation2 + $0x10] sm:$0xff]
    %v99 = vld [vmem:[#allocation2 + $0x18] sm:$0xff]
    %v100 = vld [vmem:[%s2] sm:$0x1]
    %v102 = vperm.slane %v100, 0
    %v104 = vadd.f32 %v96, %v102
    %v105 = vadd.f32 %v97, %v102
    %v106 = vadd.f32 %v98, %v102
    %v107 = vadd.f32 %v99, %v102
    %v108 = vpack.c.bf16 %v104, %v104
    %v109 = vpack.c.bf16 %v105, %v105
    %v110 = vpack.c.bf16 %v106, %v106
    %v111 = vpack.c.bf16 %v107, %v107
    %vm112 = vcmask 781312
    %113 = vst.msk [vmem:[%s3] sm:$0xf] %vm112, %v108
    %114 = vst.msk [vmem:[%s3 + $0x4] sm:$0xf] %vm112, %v109
    %115 = vst.msk [vmem:[%s3 + $0x8] sm:$0xf] %vm112, %v110
    %116 = vst.msk [vmem:[%s3 + $0xc] sm:$0xf] %vm112, %v111
  $region21: #{roberta_sim_forward.12} parent=0 // pred_fallthru
    _
  // Predicated region
  $region22: #{roberta_sim_forward.12} parent=0 // pred_check
    _
  $region23: #{roberta_sim_forward.12} parent=0 // pred_check_branch
    %118 = sbr.rel (0) target = $region25
  $region24: #{roberta_sim_forward.12} parent=0 // pred_region
    _
  $region25: #{roberta_sim_forward.12} parent=0 // pred_fallthru
    _
  // Predicated region
  $region26: #{roberta_sim_forward.12} parent=0 // pred_check
    _
  $region27: #{roberta_sim_forward.12} parent=0 // pred_check_branch
    %120 = sbr.rel (0) target = $region29
  $region28: #{roberta_sim_forward.12} parent=0 // pred_region
    _
  $region29: #{roberta_sim_forward.12} parent=0 // pred_fallthru
    _

// kernel: roberta_sim_forward.14
$region0: #{roberta_sim_forward.14}
  #allocation0 [shape = 'u32[]', space=smem, size = 0x4, offset = 0x4, fixed_abs, tag = 'smem constant byte address 0x4 - core index']
  #allocation1 [shape = 'u32[72,128]{1,0:T(1,128)}', space=vmem, size = 0x9000, scoped, tag = 'internal scratch']
  #allocation2 [shape = 'f32[32,32]{1,0:T(8,128)}', space=vmem, size = 0x4000, scoped, tag = 'scratch operand']
  %s0 = inlined_call_operand.vmem [shape: bf16[32,32], index: 0, kind: input, shape index: {}]
  %s1 = inlined_call_operand.vmem [shape: bf16[32,32], index: 1, kind: input, shape index: {}]
  %s2 = inlined_call_operand.vmem [shape: f32[1,32], index: 2, kind: input, shape index: {}]
  %s3 = inlined_call_operand.vmem [shape: bf16[32,32], index: 3, kind: input, shape index: {}]
  %s4 = inlined_call_operand.vmem [shape: f32[1,32], index: 4, kind: input, shape index: {}]
  %s5 = inlined_call_operand.vmem [shape: f32[1,32], index: 5, kind: input, shape index: {}]
  %s6 = inlined_call_operand.vmem [shape: bf16[32,32], index: 6, kind: output, shape index: {}]
  %s7 = sld [smem:[#allocation0]]
  $region42: #{roberta_sim_forward.14} parent=0
    _
  %s9 = ssub.s32 1, %s7
  %s10 = scalar_select 0, %s9, %s7
  // Predicated region
  $region2: #{roberta_sim_forward.14} parent=0 // pred_check
    _
  $region3: #{roberta_sim_forward.14} parent=0 // pred_check_branch
    %12 = sbr.rel (0) target = $region5
  $region4: #{roberta_sim_forward.14} parent=0 // pred_region
    _
  $region5: #{roberta_sim_forward.14} parent=0 // pred_fallthru
    _
  // Predicated region
  $region6: #{roberta_sim_forward.14} parent=0 // pred_check
    _
  $region7: #{roberta_sim_forward.14} parent=0 // pred_check_branch
    %14 = sbr.rel (0) target = $region9
  $region8: #{roberta_sim_forward.14} parent=0 // pred_region
    _
  $region9: #{roberta_sim_forward.14} parent=0 // pred_fallthru
    _
  // Predicated region
  $region10: #{roberta_sim_forward.14} parent=0 // pred_check
    _
  $region11: #{roberta_sim_forward.14} parent=0 // pred_check_branch
    %16 = sbr.rel (0) target = $region13
  $region12: #{roberta_sim_forward.14} parent=0 // pred_region
    _
  $region13: #{roberta_sim_forward.14} parent=0 // pred_fallthru
    _
  // Predicated region
  $region14: #{roberta_sim_forward.14} parent=0 // pred_check
    _
  $region15: #{roberta_sim_forward.14} parent=0 // pred_check_branch
    %18 = sbr.rel (0) target = $region17
  $region16: #{roberta_sim_forward.14} parent=0 // pred_region
    _
  $region17: #{roberta_sim_forward.14} parent=0 // pred_fallthru
    _
  // Predicated region
  $region18: #{roberta_sim_forward.14} parent=0 // pred_check
    _
  $region19: #{roberta_sim_forward.14} parent=0 // pred_check_branch
    %20 = sbr.rel (0) target = $region21
  $region20: #{roberta_sim_forward.14} parent=0 // pred_region
    _
  $region21: #{roberta_sim_forward.14} parent=0 // pred_fallthru
    _
  // Predicated region
  $region22: #{roberta_sim_forward.14} parent=0 // pred_check
    _
  $region23: #{roberta_sim_forward.14} parent=0 // pred_check_branch
    %22 = sbr.rel (0) target = $region25
  $region24: #{roberta_sim_forward.14} parent=0 // pred_region
    _
  $region25: #{roberta_sim_forward.14} parent=0 // pred_fallthru
    _
  %p24 = scmp.eq.s32.totalorder 0, 0
  // Predicated region
  $region26: #{roberta_sim_forward.14} parent=0 // pred_check
    %p25 = pneg %p24
  $region27: #{roberta_sim_forward.14} parent=0 // pred_check_branch
    %27 = sbr.rel (%p25) target = $region29
  $region28: #{roberta_sim_forward.14} parent=0 // pred_region
    %vm28 = vcmask 261120
    %29 = vst.msk [vmem:[#allocation2] sm:$0xff] %vm28, 0.0
    %30 = vst.msk [vmem:[#allocation2 + $0x8] sm:$0xff] %vm28, 0.0
    %31 = vst.msk [vmem:[#allocation2 + $0x10] sm:$0xff] %vm28, 0.0
    %32 = vst.msk [vmem:[#allocation2 + $0x18] sm:$0xff] %vm28, 0.0
  $region29: #{roberta_sim_forward.14} parent=0 // pred_fallthru
    _
  %v33 = vld [vmem:[#allocation2] sm:$0xff]
  %v34 = vld [vmem:[#allocation2 + $0x8] sm:$0xff]
  %v35 = vld [vmem:[#allocation2 + $0x10] sm:$0xff]
  %v36 = vld [vmem:[#allocation2 + $0x18] sm:$0xff]
  %v37 = vld [vmem:[%s0] sm:$0xf]
  %v38 = vld [vmem:[%s0 + $0x4] sm:$0xf]
  %v39 = vld [vmem:[%s0 + $0x8] sm:$0xf]
  %v40 = vld [vmem:[%s0 + $0xc] sm:$0xf]
  %v41 = vld [vmem:[%s1] sm:$0xf]
  %v42 = vld [vmem:[%s1 + $0x4] sm:$0xf]
  %v43 = vld [vmem:[%s1 + $0x8] sm:$0xf]
  %v44 = vld [vmem:[%s1 + $0xc] sm:$0xf]
  %v49 = vunpack.c.l.b16 %v37
  %v50 = vunpack.c.l.b16 %v38
  %v51 = vunpack.c.l.b16 %v39
  %v52 = vunpack.c.l.b16 %v40
  %v53 = vpack.c.b16 %v50, %v49
  %v54 = vpack.c.b16 %v52, %v51
  %v59 = vunpack.c.l.b16 %v41
  %v60 = vunpack.c.l.b16 %v42
  %v61 = vunpack.c.l.b16 %v43
  %v62 = vunpack.c.l.b16 %v44
  %v63 = vpack.c.b16 %v60, %v59
  %v64 = vpack.c.b16 %v62, %v61
  %vm67 = vcmask 261120
  %v69 = vsel %vm67, %v53, 0
  %v72 = vsel %vm67, %v54, 0
  %74 = vmatpush.bf16.msra.mxu0 0
  %75 = vmatpush.bf16.msra.mxu0 0
  %76 = vmatpush.bf16.msra.mxu0 0
  %77 = vmatpush.bf16.msra.mxu0 0
  %78 = vmatpush.bf16.msra.mxu0 0
  %79 = vmatpush.bf16.msra.mxu0 0
  %80 = vmatpush.bf16.msra.mxu0 %v64
  %81 = vmatpush.bf16.msra.mxu0 %v63
  %82 = vmatmul.bf16.gmra.mxu0 %v69
  %v83 = vpop.f32.mrf.mxu0
  %v84 = vadd.f32 0.0, %v83
  %v85 = vpop.f32.mrf.mxu0
  %v86 = vadd.f32 0.0, %v85
  %87 = vmatmul.bf16.gmra.mxu0 %v72
  %v88 = vpop.f32.mrf.mxu0
  %v89 = vadd.f32 0.0, %v88
  %v90 = vpop.f32.mrf.mxu0
  %v91 = vadd.f32 0.0, %v90
  %92 = vdwg.mxu0
  %v93 = vadd.f32 %v33, %v84
  %v94 = vadd.f32 %v34, %v86
  %v95 = vadd.f32 %v35, %v89
  %v96 = vadd.f32 %v36, %v91
  %97 = vst.msk [vmem:[#allocation2] sm:$0xff] %vm67, %v93
  %98 = vst.msk [vmem:[#allocation2 + $0x8] sm:$0xff] %vm67, %v94
  %99 = vst.msk [vmem:[#allocation2 + $0x10] sm:$0xff] %vm67, %v95
  %100 = vst.msk [vmem:[#allocation2 + $0x18] sm:$0xff] %vm67, %v96
  // Predicated region
  $region30: #{roberta_sim_forward.14} parent=0 // pred_check
    %p101 = pneg %p24
  $region31: #{roberta_sim_forward.14} parent=0 // pred_check_branch
    %103 = sbr.rel (%p101) target = $region33
  $region32: #{roberta_sim_forward.14} parent=0 // pred_region
    %v104 = vld [vmem:[#allocation2] sm:$0xff]
    %v105 = vld [vmem:[#allocation2 + $0x8] sm:$0xff]
    %v106 = vld [vmem:[#allocation2 + $0x10] sm:$0xff]
    %v107 = vld [vmem:[#allocation2 + $0x18] sm:$0xff]
    %v108 = vld [vmem:[%s2] sm:$0x1]
    %v110 = vperm.slane %v108, 0
    %v112 = vadd.f32 %v104, %v110
    %v113 = vadd.f32 %v105, %v110
    %v114 = vadd.f32 %v106, %v110
    %v115 = vadd.f32 %v107, %v110
    %v116 = vld [vmem:[%s3] sm:$0xf]
    %v117 = vld [vmem:[%s3 + $0x4] sm:$0xf]
    %v118 = vld [vmem:[%s3 + $0x8] sm:$0xf]
    %v119 = vld [vmem:[%s3 + $0xc] sm:$0xf]
    %v120 = vunpack.c.l.bf16 %v116
    %v121 = vunpack.c.l.bf16 %v117
    %v122 = vunpack.c.l.bf16 %v118
    %v123 = vunpack.c.l.bf16 %v119
    %v124 = vadd.f32 %v112, %v120
    %v125 = vadd.f32 %v113, %v121
    %v126 = vadd.f32 %v114, %v122
    %v127 = vadd.f32 %v115, %v123
    %v128 = vsel %vm67, %v124, 0.0
    %129 = vadd.xlane.f32.xlu0 %v128
    %v130 = vpop.xlane.xlu0 %129
    %v131 = vsel %vm67, %v125, 0.0
    %132 = vadd.xlane.f32.xlu0 %v131
    %v133 = vpop.xlane.xlu0 %132
    %v134 = vsel %vm67, %v126, 0.0
    %135 = vadd.xlane.f32.xlu0 %v134
    %v136 = vpop.xlane.xlu0 %135
    %v137 = vsel %vm67, %v127, 0.0
    %138 = vadd.xlane.f32.xlu0 %v137
    %v139 = vpop.xlane.xlu0 %138
    %v140 = vrcp.pop 32.0
    %v141 = vmul.f32 32.0, %v140
    %v142 = vsub.f32 1.0, %v141
    %v143 = vmul.f32 %v140, %v142
    %v144 = vadd.f32 %v140, %v143
    %vm145 = vweird.f32 %v140
    %v146 = vsel %vm145, %v140, %v144
    %v147 = vmul.f32 %v130, %v146
    %v148 = vmul.f32 %v133, %v146
    %v149 = vmul.f32 %v136, %v146
    %v150 = vmul.f32 %v139, %v146
    %v151 = vsub.f32 %v124, %v147
    %v152 = vsub.f32 %v125, %v148
    %v153 = vsub.f32 %v126, %v149
    %v154 = vsub.f32 %v127, %v150
    %v155 = vmul.f32 %v151, %v151
    %v156 = vmul.f32 %v152, %v152
    %v157 = vmul.f32 %v153, %v153
    %v158 = vmul.f32 %v154, %v154
    %v159 = vsel %vm67, %v155, 0.0
    %160 = vadd.xlane.f32.xlu0 %v159
    %v161 = vpop.xlane.xlu0 %160
    %v162 = vsel %vm67, %v156, 0.0
    %163 = vadd.xlane.f32.xlu0 %v162
    %v164 = vpop.xlane.xlu0 %163
    %v165 = vsel %vm67, %v157, 0.0
    %166 = vadd.xlane.f32.xlu0 %v165
    %v167 = vpop.xlane.xlu0 %166
    %v168 = vsel %vm67, %v158, 0.0
    %169 = vadd.xlane.f32.xlu0 %v168
    %v170 = vpop.xlane.xlu0 %169
    %v171 = vmul.f32 %v161, %v146
    %v172 = vmul.f32 %v164, %v146
    %v173 = vmul.f32 %v167, %v146
    %v174 = vmul.f32 %v170, %v146
    %v175 = vadd.f32 %v171, 1e-05
    %v176 = vadd.f32 %v172, 1e-05
    %v177 = vadd.f32 %v173, 1e-05
    %v178 = vadd.f32 %v174, 1e-05
    %v179 = vrsqrt.pop %v175
    %v180 = vmul.f32 %v179, %v175
    %v181 = vmul.f32 %v180, %v179
    %v182 = vmul.f32 0.5, %v181
    %v183 = vsub.f32 1.5, %v182
    %v184 = vmul.f32 %v179, %v183
    %vm185 = vweird.f32 %v175
    %vm186 = vweird.f32 %v179
    %vm187 = vmor %vm185, %vm186
    %v188 = vsel %vm187, %v179, %v184
    %v189 = vrsqrt.pop %v176
    %v190 = vmul.f32 %v189, %v176
    %v191 = vmul.f32 %v190, %v189
    %v192 = vmul.f32 0.5, %v191
    %v193 = vsub.f32 1.5, %v192
    %v194 = vmul.f32 %v189, %v193
    %vm195 = vweird.f32 %v176
    %vm196 = vweird.f32 %v189
    %vm197 = vmor %vm195, %vm196
    %v198 = vsel %vm197, %v189, %v194
    %v199 = vrsqrt.pop %v177
    %v200 = vmul.f32 %v199, %v177
    %v201 = vmul.f32 %v200, %v199
    %v202 = vmul.f32 0.5, %v201
    %v203 = vsub.f32 1.5, %v202
    %v204 = vmul.f32 %v199, %v203
    %vm205 = vweird.f32 %v177
    %vm206 = vweird.f32 %v199
    %vm207 = vmor %vm205, %vm206
    %v208 = vsel %vm207, %v199, %v204
    %v209 = vrsqrt.pop %v178
    %v210 = vmul.f32 %v209, %v178
    %v211 = vmul.f32 %v210, %v209
    %v212 = vmul.f32 0.5, %v211
    %v213 = vsub.f32 1.5, %v212
    %v214 = vmul.f32 %v209, %v213
    %vm215 = vweird.f32 %v178
    %vm216 = vweird.f32 %v209
    %vm217 = vmor %vm215, %vm216
    %v218 = vsel %vm217, %v209, %v214
    %v219 = vmul.f32 %v151, %v188
    %v220 = vmul.f32 %v152, %v198
    %v221 = vmul.f32 %v153, %v208
    %v222 = vmul.f32 %v154, %v218
    %v223 = vld [vmem:[%s4] sm:$0x1]
    %v225 = vperm.slane %v223, 0
    %v227 = vmul.f32 %v219, %v225
    %v228 = vmul.f32 %v220, %v225
    %v229 = vmul.f32 %v221, %v225
    %v230 = vmul.f32 %v222, %v225
    %v231 = vld [vmem:[%s5] sm:$0x1]
    %v233 = vperm.slane %v231, 0
    %v235 = vadd.f32 %v227, %v233
    %v236 = vadd.f32 %v228, %v233
    %v237 = vadd.f32 %v229, %v233
    %v238 = vadd.f32 %v230, %v233
    %v239 = vpack.c.bf16 %v235, %v235
    %v240 = vpack.c.bf16 %v236, %v236
    %v241 = vpack.c.bf16 %v237, %v237
    %v242 = vpack.c.bf16 %v238, %v238
    %vm243 = vcmask 257024
    %244 = vst.msk [vmem:[%s6] sm:$0xf] %vm243, %v239
    %245 = vst.msk [vmem:[%s6 + $0x4] sm:$0xf] %vm243, %v240
    %246 = vst.msk [vmem:[%s6 + $0x8] sm:$0xf] %vm243, %v241
    %247 = vst.msk [vmem:[%s6 + $0xc] sm:$0xf] %vm243, %v242
  $region33: #{roberta_sim_forward.14} parent=0 // pred_fallthru
    _
  // Predicated region
  $region34: #{roberta_sim_forward.14} parent=0 // pred_check
    _
  $region35: #{roberta_sim_forward.14} parent=0 // pred_check_branch
    %249 = sbr.rel (0) target = $region37
  $region36: #{roberta_sim_forward.14} parent=0 // pred_region
    _
  $region37: #{roberta_sim_forward.14} parent=0 // pred_fallthru
    _
  // Predicated region
  $region38: #{roberta_sim_forward.14} parent=0 // pred_check
    _
  $region39: #{roberta_sim_forward.14} parent=0 // pred_check_branch
    %251 = sbr.rel (0) target = $region41
  $region40: #{roberta_sim_forward.14} parent=0 // pred_region
    _
  $region41: #{roberta_sim_forward.14} parent=0 // pred_fallthru
    _

// kernel: roberta_sim_forward.13
$region0: #{roberta_sim_forward.13}
  #allocation0 [shape = 'u32[]', space=smem, size = 0x4, offset = 0x4, fixed_abs, tag = 'smem constant byte address 0x4 - core index']
  #allocation1 [shape = 'u32[72,128]{1,0:T(1,128)}', space=vmem, size = 0x9000, scoped, tag = 'internal scratch']
  %s0 = inlined_call_operand.vmem [shape: bf16[4,8,96], index: 0, kind: input, shape index: {}]
  %s1 = inlined_call_operand.vmem [shape: f32[4,1,8], index: 1, kind: input, shape index: {}]
  %s2 = inlined_call_operand.vmem [shape: bf16[4,8,32], index: 2, kind: output, shape index: {}]
  %s3 = sld [smem:[#allocation0]]
  $region41: #{roberta_sim_forward.13} parent=0
    _
  %s5 = ssub.s32 1, %s3
  %s6 = scalar_select 0, %s5, %s3
  loop: start=0, step=1, limit=6
  $region2: #{roberta_sim_forward.13} parent=0 // loop_pre_header
    _
  $region3: #{roberta_sim_forward.13} parent=0 // loop_header
    %s8 = sphi 0, %s12
    %p9 = scmp.ge.s32.totalorder %s8, 6
    %s18 = sphi 0, %s20
    %s21 = sphi 0, %s18
    %s22 = sphi 0, %s21
    %s38 = sphi 0, %s22
    %s44 = sphi 0, %s46
    %s47 = sphi 0, %s44
    %s48 = sphi 0, %s47
    %s64 = sphi 0, %s48
    %s70 = sphi 0, %s72
    %s73 = sphi 0, %s70
    %s74 = sphi 0, %s73
    %s90 = sphi 0, %s74
  $region4: #{roberta_sim_forward.13} parent=0 // loop_header_branch
    %11 = sbr.rel (%p9) target = $region8
  $region5: #{roberta_sim_forward.13} parent=0 // loop_body
    %s13 = ssub.s32 %s8, 1
    %s14 = ssub.s32 %s8, 2
    %s15 = sadd.s32 %s8, 1
    %s16 = ssub.s32 %s8, %s15
    %p17 = scmp.eq.s32.totalorder %s16, 0
    %s19 = sadd.s32 %s18, 1
    %s20 = scalar_select %p17, %s18, %s19
    %p23 = pneg %p17
    %p24 = scmp.eq.s32.totalorder %s8, 3
    %p25 = por %p23, %p24
    %p26 = scmp.ne.s32.totalorder %s18, %s21
    %p27 = scmp.eq.s32.totalorder %s8, 0
    %p28 = por %p26, %p27
    %p29 = scmp.ne.s32.totalorder %s18, %s21
    %p30 = scmp.eq.s32.totalorder %s13, 3
    %p31 = por %p29, %p30
    %p32 = scmp.ne.s32.totalorder %s21, %s22
    %p33 = scmp.eq.s32.totalorder %s13, 0
    %p34 = por %p32, %p33
    %p35 = scmp.ne.s32.totalorder %s21, %s22
    %p36 = scmp.eq.s32.totalorder %s14, 3
    %p37 = por %p35, %p36
    %p39 = scmp.ne.s32.totalorder %s22, %s38
    %p40 = scmp.eq.s32.totalorder %s14, 0
    %p41 = por %p39, %p40
    %s42 = ssub.s32 %s8, %s15
    %p43 = scmp.eq.s32.totalorder %s42, 0
    %s45 = sadd.s32 %s44, 1
    %s46 = scalar_select %p43, %s44, %s45
    %p49 = pneg %p43
    %p50 = scmp.eq.s32.totalorder %s8, 3
    %p51 = por %p49, %p50
    %p52 = scmp.ne.s32.totalorder %s44, %s47
    %p53 = scmp.eq.s32.totalorder %s8, 0
    %p54 = por %p52, %p53
    %p55 = scmp.ne.s32.totalorder %s44, %s47
    %p56 = scmp.eq.s32.totalorder %s13, 3
    %p57 = por %p55, %p56
    %p58 = scmp.ne.s32.totalorder %s47, %s48
    %p59 = scmp.eq.s32.totalorder %s13, 0
    %p60 = por %p58, %p59
    %p61 = scmp.ne.s32.totalorder %s47, %s48
    %p62 = scmp.eq.s32.totalorder %s14, 3
    %p63 = por %p61, %p62
    %p65 = scmp.ne.s32.totalorder %s48, %s64
    %p66 = scmp.eq.s32.totalorder %s14, 0
    %p67 = por %p65, %p66
    %s68 = ssub.s32 %s8, %s15
    %p69 = scmp.eq.s32.totalorder %s68, 0
    %s71 = sadd.s32 %s70, 1
    %s72 = scalar_select %p69, %s70, %s71
    %p75 = pneg %p69
    %p76 = scmp.eq.s32.totalorder %s8, 3
    %p77 = por %p75, %p76
    %p78 = scmp.ne.s32.totalorder %s70, %s73
    %p79 = scmp.eq.s32.totalorder %s8, 0
    %p80 = por %p78, %p79
    %p81 = scmp.ne.s32.totalorder %s70, %s73
    %p82 = scmp.eq.s32.totalorder %s13, 3
    %p83 = por %p81, %p82
    %p84 = scmp.ne.s32.totalorder %s73, %s74
    %p85 = scmp.eq.s32.totalorder %s13, 0
    %p86 = por %p84, %p85
    %p87 = scmp.ne.s32.totalorder %s73, %s74
    %p88 = scmp.eq.s32.totalorder %s14, 3
    %p89 = por %p87, %p88
    %p91 = scmp.ne.s32.totalorder %s74, %s90
    %p92 = scmp.eq.s32.totalorder %s14, 0
    %p93 = por %p91, %p92
    %p94 = scmp.le.s32.totalorder 1, %s8
    %p95 = scmp.lt.s32.totalorder %s8, 5
    %p96 = pnand %p94, %p95
    %p97 = pneg %p96
    // Predicated region
    $region9: #{roberta_sim_forward.13} parent=5 // pred_check
      _
    $region10: #{roberta_sim_forward.13} parent=5 // pred_check_branch
      %99 = sbr.rel (%p96) target = $region12
    $region11: #{roberta_sim_forward.13} parent=5 // pred_region
      %s100 = ssub.s32 %s8, 1
    $region12: #{roberta_sim_forward.13} parent=5 // pred_fallthru
      _
    %p101 = scmp.lt.s32.totalorder %s8, 4
    // Predicated region
    $region13: #{roberta_sim_forward.13} parent=5 // pred_check
      %p102 = pneg %p101
    $region14: #{roberta_sim_forward.13} parent=5 // pred_check_branch
      %104 = sbr.rel (%p102) target = $region16
    $region15: #{roberta_sim_forward.13} parent=5 // pred_region
      // Predicated region
      $region17: #{roberta_sim_forward.13} parent=15 // pred_check
        %p105 = pneg %p28
      $region18: #{roberta_sim_forward.13} parent=15 // pred_check_branch
        %107 = sbr.rel (%p105) target = $region20
      $region19: #{roberta_sim_forward.13} parent=15 // pred_region
        %p108 = scmp.lt.s32.totalorder %s8, 3
        %s109 = scalar_select %p108, %s8, 3
        %s110 = smul.addr %s109, 4
        %s111 = scalar_lea.vmem %s0, %s110
      $region20: #{roberta_sim_forward.13} parent=15 // pred_fallthru
        _
      // Predicated region
      $region21: #{roberta_sim_forward.13} parent=15 // pred_check
        %p112 = pneg %p54
      $region22: #{roberta_sim_forward.13} parent=15 // pred_check_branch
        %114 = sbr.rel (%p112) target = $region24
      $region23: #{roberta_sim_forward.13} parent=15 // pred_region
        %p115 = scmp.lt.s32.totalorder %s8, 3
        %s116 = scalar_select %p115, %s8, 3
        %s117 = scalar_lea.vmem %s1, %s116
      $region24: #{roberta_sim_forward.13} parent=15 // pred_fallthru
        _
    $region16: #{roberta_sim_forward.13} parent=5 // pred_fallthru
      _
    %p118 = scmp.le.s32.totalorder 1, %s8
    %p119 = scmp.lt.s32.totalorder %s8, 5
    %p120 = pnand %p118, %p119
    %p121 = pneg %p120
    // Predicated region
    $region25: #{roberta_sim_forward.13} parent=5 // pred_check
      _
    $region26: #{roberta_sim_forward.13} parent=5 // pred_check_branch
      %123 = sbr.rel (%p120) target = $region28
    $region27: #{roberta_sim_forward.13} parent=5 // pred_region
      %s124 = ssub.s32 %s8, 1
      %p125 = scmp.lt.s32.totalorder %s13, 3
      %s126 = scalar_select %p125, %s13, 3
      %s127 = smul.addr %s126, 4
      %s128 = scalar_lea.vmem %s0, %s127
      %p129 = pneg %p34
      %p130 = pneg %p31
      %p131 = scmp.lt.s32.totalorder %s13, 3
      %s132 = scalar_select %p131, %s13, 3
      %s133 = scalar_lea.vmem %s1, %s132
      %p134 = pneg %p60
      %p135 = pneg %p57
      %p136 = pneg %p86
      %p137 = pneg %p83
      %p138 = scmp.lt.s32.totalorder %s13, 3
      %s139 = scalar_select %p138, %s13, 3
      %s140 = smul.addr %s139, 4
      %s141 = scalar_lea.vmem %s2, %s140
      %p142 = scmp.lt.s32.totalorder %s13, 3
      %s143 = scalar_select %p142, %s13, 3
      %s144 = smul.addr %s143, 4
      %s145 = scalar_lea.vmem %s0, %s144
      %p146 = scmp.lt.s32.totalorder %s13, 3
      %s147 = scalar_select %p146, %s13, 3
      %s148 = scalar_lea.vmem %s1, %s147
      %p149 = scmp.lt.s32.totalorder %s13, 3
      %s150 = scalar_select %p149, %s13, 3
      %s151 = smul.addr %s150, 4
      %s152 = scalar_lea.vmem %s2, %s151
      %v154 = vld [vmem:[%s145] sm:$0xf]
      %v155 = vld [vmem:[%s148] sm:$0x1]
      %v157 = vunpack.c.l.b16 %v154
      %v158 = vpack.c.b16 %v157, %v157
      %159 = vrot.lane.b32.xlu0 %v158, 96
      %v160 = vpop.permute.xlu0 %159
      %vm161 = vcmask 64512
      %v163 = vsel %vm161, %v154, 0
      %v166 = vsel %vm161, %v160, 0
      %168 = vmatpush.bf16.xpose.msra.mxu0 0
      %169 = vmatpush.bf16.xpose.msra.mxu0 0
      %170 = vmatpush.bf16.xpose.msra.mxu0 0
      %171 = vmatpush.bf16.xpose.msra.mxu0 0
      %172 = vmatpush.bf16.xpose.msra.mxu0 0
      %173 = vmatpush.bf16.xpose.msra.mxu0 0
      %174 = vmatpush.bf16.xpose.msra.mxu0 0
      %175 = vmatpush.bf16.xpose.msra.mxu0 %v166
      %176 = vmatmul.bf16.gmra.mxu0 %v163
      %v177 = vpop.f32.mrf.mxu0
      %v178 = vadd.f32 0.0, %v177
      %v179 = vpop.f32.mrf.mxu0
      %180 = vdwg.mxu0
      %v181 = vmul.f32 %v178, 0.35355338
      %v183 = vperm.slane %v155, 0
      %v185 = vadd.f32 %v181, %v183
      %v186 = vsel %vm161, %v185, -inf
      %187 = vmax.xlane.f32.xlu0 %v186
      %v188 = vpop.xlane.xlu0 %187
      %v189 = vsub.f32 %v185, %v188
      %v190 = vmul.f32 %v189, 1.442695
      %v191 = vpow.pop %v190
      %v192 = vsel %vm161, %v191, 0.0
      %193 = vadd.xlane.f32.xlu0 %v192
      %v194 = vpop.xlane.xlu0 %193
      %v195 = vrcp.pop %v194
      %v196 = vmul.f32 %v191, %v195
      %v197 = vpack.c.bf16 %v196, %v196
      %198 = vrot.lane.b32.xlu0 %v158, 64
      %v199 = vpop.permute.xlu0 %198
      %v201 = vsel %vm161, %v197, 0
      %vm203 = vcmask 1043456
      %v205 = vsel %vm203, %v199, 0
      %207 = vmatpush.bf16.msra.mxu0 0
      %208 = vmatpush.bf16.msra.mxu0 0
      %209 = vmatpush.bf16.msra.mxu0 0
      %210 = vmatpush.bf16.msra.mxu0 0
      %211 = vmatpush.bf16.msra.mxu0 0
      %212 = vmatpush.bf16.msra.mxu0 0
      %213 = vmatpush.bf16.msra.mxu0 0
      %214 = vmatpush.bf16.msra.mxu0 %v205
      %215 = vmatmul.bf16.gmra.mxu0 %v201
      %v216 = vpop.f32.mrf.mxu0
      %v217 = vadd.f32 0.0, %v216
      %v218 = vpop.f32.mrf.mxu0
      %219 = vdwg.mxu0
      %220 = vrot.lane.b32.xlu0 %v158, 120
      %v221 = vpop.permute.xlu0 %220
      %222 = vrot.lane.b32.xlu0 %v158, 88
      %v223 = vpop.permute.xlu0 %222
      %v225 = vsel %vm161, %v221, 0
      %v228 = vsel %vm161, %v223, 0
      %230 = vmatpush.bf16.xpose.msra.mxu0 0
      %231 = vmatpush.bf16.xpose.msra.mxu0 0
      %232 = vmatpush.bf16.xpose.msra.mxu0 0
      %233 = vmatpush.bf16.xpose.msra.mxu0 0
      %234 = vmatpush.bf16.xpose.msra.mxu0 0
      %235 = vmatpush.bf16.xpose.msra.mxu0 0
      %236 = vmatpush.bf16.xpose.msra.mxu0 0
      %237 = vmatpush.bf16.xpose.msra.mxu0 %v228
      %238 = vmatmul.bf16.gmra.mxu0 %v225
      %v239 = vpop.f32.mrf.mxu0
      %v240 = vadd.f32 0.0, %v239
      %v241 = vpop.f32.mrf.mxu0
      %242 = vdwg.mxu0
      %v243 = vmul.f32 %v240, 0.35355338
      %v244 = vadd.f32 %v243, %v183
      %v245 = vsel %vm161, %v244, -inf
      %246 = vmax.xlane.f32.xlu0 %v245
      %v247 = vpop.xlane.xlu0 %246
      %v248 = vsub.f32 %v244, %v247
      %v249 = vmul.f32 %v248, 1.442695
      %v250 = vpow.pop %v249
      %v251 = vsel %vm161, %v250, 0.0
      %252 = vadd.xlane.f32.xlu0 %v251
      %v253 = vpop.xlane.xlu0 %252
      %v254 = vrcp.pop %v253
      %v255 = vmul.f32 %v250, %v254
      %v256 = vpack.c.bf16 %v255, %v255
      %257 = vrot.lane.b32.xlu0 %v158, 56
      %v258 = vpop.permute.xlu0 %257
      %v260 = vsel %vm161, %v256, 0
      %v263 = vsel %vm203, %v258, 0
      %265 = vmatpush.bf16.msra.mxu0 0
      %266 = vmatpush.bf16.msra.mxu0 0
      %267 = vmatpush.bf16.msra.mxu0 0
      %268 = vmatpush.bf16.msra.mxu0 0
      %269 = vmatpush.bf16.msra.mxu0 0
      %270 = vmatpush.bf16.msra.mxu0 0
      %271 = vmatpush.bf16.msra.mxu0 0
      %272 = vmatpush.bf16.msra.mxu0 %v263
      %273 = vmatmul.bf16.gmra.mxu0 %v260
      %v274 = vpop.f32.mrf.mxu0
      %v275 = vadd.f32 0.0, %v274
      %v276 = vpop.f32.mrf.mxu0
      %277 = vdwg.mxu0
      %278 = vrot.lane.b32.xlu0 %v158, 112
      %v279 = vpop.permute.xlu0 %278
      %280 = vrot.lane.b32.xlu0 %v158, 80
      %v281 = vpop.permute.xlu0 %280
      %v283 = vsel %vm161, %v279, 0
      %v286 = vsel %vm161, %v281, 0
      %288 = vmatpush.bf16.xpose.msra.mxu0 0
      %289 = vmatpush.bf16.xpose.msra.mxu0 0
      %290 = vmatpush.bf16.xpose.msra.mxu0 0
      %291 = vmatpush.bf16.xpose.msra.mxu0 0
      %292 = vmatpush.bf16.xpose.msra.mxu0 0
      %293 = vmatpush.bf16.xpose.msra.mxu0 0
      %294 = vmatpush.bf16.xpose.msra.mxu0 0
      %295 = vmatpush.bf16.xpose.msra.mxu0 %v286
      %296 = vmatmul.bf16.gmra.mxu0 %v283
      %v297 = vpop.f32.mrf.mxu0
      %v298 = vadd.f32 0.0, %v297
      %v299 = vpop.f32.mrf.mxu0
      %300 = vdwg.mxu0
      %v301 = vmul.f32 %v298, 0.35355338
      %v302 = vadd.f32 %v301, %v183
      %v303 = vsel %vm161, %v302, -inf
      %304 = vmax.xlane.f32.xlu0 %v303
      %v305 = vpop.xlane.xlu0 %304
      %v306 = vsub.f32 %v302, %v305
      %v307 = vmul.f32 %v306, 1.442695
      %v308 = vpow.pop %v307
      %v309 = vsel %vm161, %v308, 0.0
      %310 = vadd.xlane.f32.xlu0 %v309
      %v311 = vpop.xlane.xlu0 %310
      %v312 = vrcp.pop %v311
      %v313 = vmul.f32 %v308, %v312
      %v314 = vpack.c.bf16 %v313, %v313
      %315 = vrot.lane.b32.xlu0 %v158, 48
      %v316 = vpop.permute.xlu0 %315
      %v318 = vsel %vm161, %v314, 0
      %v321 = vsel %vm203, %v316, 0
      %323 = vmatpush.bf16.msra.mxu0 0
      %324 = vmatpush.bf16.msra.mxu0 0
      %325 = vmatpush.bf16.msra.mxu0 0
      %326 = vmatpush.bf16.msra.mxu0 0
      %327 = vmatpush.bf16.msra.mxu0 0
      %328 = vmatpush.bf16.msra.mxu0 0
      %329 = vmatpush.bf16.msra.mxu0 0
      %330 = vmatpush.bf16.msra.mxu0 %v321
      %331 = vmatmul.bf16.gmra.mxu0 %v318
      %v332 = vpop.f32.mrf.mxu0
      %v333 = vadd.f32 0.0, %v332
      %v334 = vpop.f32.mrf.mxu0
      %335 = vdwg.mxu0
      %336 = vrot.lane.b32.xlu0 %v158, 104
      %v337 = vpop.permute.xlu0 %336
      %338 = vrot.lane.b32.xlu0 %v158, 72
      %v339 = vpop.permute.xlu0 %338
      %v341 = vsel %vm161, %v337, 0
      %v344 = vsel %vm161, %v339, 0
      %346 = vmatpush.bf16.xpose.msra.mxu0 0
      %347 = vmatpush.bf16.xpose.msra.mxu0 0
      %348 = vmatpush.bf16.xpose.msra.mxu0 0
      %349 = vmatpush.bf16.xpose.msra.mxu0 0
      %350 = vmatpush.bf16.xpose.msra.mxu0 0
      %351 = vmatpush.bf16.xpose.msra.mxu0 0
      %352 = vmatpush.bf16.xpose.msra.mxu0 0
      %353 = vmatpush.bf16.xpose.msra.mxu0 %v344
      %354 = vmatmul.bf16.gmra.mxu0 %v341
      %v355 = vpop.f32.mrf.mxu0
      %v356 = vadd.f32 0.0, %v355
      %v357 = vpop.f32.mrf.mxu0
      %358 = vdwg.mxu0
      %v359 = vmul.f32 %v356, 0.35355338
      %v360 = vadd.f32 %v359, %v183
      %v361 = vsel %vm161, %v360, -inf
      %362 = vmax.xlane.f32.xlu0 %v361
      %v363 = vpop.xlane.xlu0 %362
      %v364 = vsub.f32 %v360, %v363
      %v365 = vmul.f32 %v364, 1.442695
      %v366 = vpow.pop %v365
      %v367 = vsel %vm161, %v366, 0.0
      %368 = vadd.xlane.f32.xlu0 %v367
      %v369 = vpop.xlane.xlu0 %368
      %v370 = vrcp.pop %v369
      %v371 = vmul.f32 %v366, %v370
      %v372 = vpack.c.bf16 %v371, %v371
      %373 = vrot.lane.b32.xlu0 %v158, 40
      %v374 = vpop.permute.xlu0 %373
      %v376 = vsel %vm161, %v372, 0
      %v379 = vsel %vm203, %v374, 0
      %381 = vmatpush.bf16.msra.mxu0 0
      %382 = vmatpush.bf16.msra.mxu0 0
      %383 = vmatpush.bf16.msra.mxu0 0
      %384 = vmatpush.bf16.msra.mxu0 0
      %385 = vmatpush.bf16.msra.mxu0 0
      %386 = vmatpush.bf16.msra.mxu0 0
      %387 = vmatpush.bf16.msra.mxu0 0
      %388 = vmatpush.bf16.msra.mxu0 %v379
      %389 = vmatmul.bf16.gmra.mxu0 %v376
      %v390 = vpop.f32.mrf.mxu0
      %v391 = vadd.f32 0.0, %v390
      %v392 = vpop.f32.mrf.mxu0
      %393 = vdwg.mxu0
      %395 = vrot.lane.b32.xlu0 %v275, 8
      %v396 = vpop.permute.xlu0 %395
      %399 = vrot.lane.b32.xlu0 %v333, 16
      %v400 = vpop.permute.xlu0 %399
      %403 = vrot.lane.b32.xlu0 %v391, 24
      %v404 = vpop.permute.xlu0 %403
      %v406 = vsel %vm161, %v217, %v396
      %vm407 = vcmask 130048
      %v408 = vsel %vm407, %v406, %v400
      %vm409 = vcmask 195584
      %v410 = vsel %vm409, %v408, %v404
      %v411 = vpack.c.bf16 %v410, %v410
      %vm412 = vcmask 257024
      %413 = vst.msk [vmem:[%s152] sm:$0xf] %vm412, %v411
      %p414 = scmp.lt.s32.totalorder %s13, 3
      %s415 = scalar_select %p414, %s13, 3
      %s416 = smul.addr %s415, 4
      %s417 = scalar_lea.vmem %s2, %s416
      // Predicated region
      $region29: #{roberta_sim_forward.13} parent=27 // pred_check
        %p418 = pneg %p83
      $region30: #{roberta_sim_forward.13} parent=27 // pred_check_branch
        %420 = sbr.rel (%p418) target = $region32
      $region31: #{roberta_sim_forward.13} parent=27 // pred_region
        _
      $region32: #{roberta_sim_forward.13} parent=27 // pred_fallthru
        _
    $region28: #{roberta_sim_forward.13} parent=5 // pred_fallthru
      _
    %p421 = scmp.le.s32.totalorder 2, %s8
    // Predicated region
    $region33: #{roberta_sim_forward.13} parent=5 // pred_check
      %p422 = pneg %p421
    $region34: #{roberta_sim_forward.13} parent=5 // pred_check_branch
      %424 = sbr.rel (%p422) target = $region36
    $region35: #{roberta_sim_forward.13} parent=5 // pred_region
      %s425 = ssub.s32 %s8, 2
      // Predicated region
      $region37: #{roberta_sim_forward.13} parent=35 // pred_check
        %p426 = pneg %p89
      $region38: #{roberta_sim_forward.13} parent=35 // pred_check_branch
        %428 = sbr.rel (%p426) target = $region40
      $region39: #{roberta_sim_forward.13} parent=35 // pred_region
        %p429 = scmp.lt.s32.totalorder %s14, 3
        %s430 = scalar_select %p429, %s14, 3
        %s431 = smul.addr %s430, 4
        %s432 = scalar_lea.vmem %s2, %s431
      $region40: #{roberta_sim_forward.13} parent=35 // pred_fallthru
        _
    $region36: #{roberta_sim_forward.13} parent=5 // pred_fallthru
      _
  $region6: #{roberta_sim_forward.13} parent=0 // loop_footer
    %s12 = sadd.s32 1, %s8
  $region7: #{roberta_sim_forward.13} parent=0 // loop_footer_branch
    %7 = sbr.rel target = $region3
  $region8: #{roberta_sim_forward.13} parent=0 // loop_exit
    _

// kernel: roberta_sim_forward.15
$region0: #{roberta_sim_forward.15}
  #allocation0 [shape = 'u32[]', space=smem, size = 0x4, offset = 0x4, fixed_abs, tag = 'smem constant byte address 0x4 - core index']
  #allocation1 [shape = 'u32[72,128]{1,0:T(1,128)}', space=vmem, size = 0x9000, scoped, tag = 'internal scratch']
  #allocation2 [shape = 'f32[32,64]{1,0:T(8,128)}', space=vmem, size = 0x4000, scoped, tag = 'scratch operand']
  %s0 = inlined_call_operand.vmem [shape: bf16[32,32], index: 0, kind: input, shape index: {}]
  %s1 = inlined_call_operand.vmem [shape: bf16[32,64], index: 1, kind: input, shape index: {}]
  %s2 = inlined_call_operand.vmem [shape: f32[1,64], index: 2, kind: input, shape index: {}]
  %s3 = inlined_call_operand.vmem [shape: bf16[32,64], index: 3, kind: output, shape index: {}]
  %s4 = sld [smem:[#allocation0]]
  $region30: #{roberta_sim_forward.15} parent=0
    _
  %s6 = ssub.s32 1, %s4
  %s7 = scalar_select 0, %s6, %s4
  // Predicated region
  $region2: #{roberta_sim_forward.15} parent=0 // pred_check
    _
  $region3: #{roberta_sim_forward.15} parent=0 // pred_check_branch
    %9 = sbr.rel (0) target = $region5
  $region4: #{roberta_sim_forward.15} parent=0 // pred_region
    _
  $region5: #{roberta_sim_forward.15} parent=0 // pred_fallthru
    _
  // Predicated region
  $region6: #{roberta_sim_forward.15} parent=0 // pred_check
    _
  $region7: #{roberta_sim_forward.15} parent=0 // pred_check_branch
    %11 = sbr.rel (0) target = $region9
  $region8: #{roberta_sim_forward.15} parent=0 // pred_region
    _
  $region9: #{roberta_sim_forward.15} parent=0 // pred_fallthru
    _
  // Predicated region
  $region10: #{roberta_sim_forward.15} parent=0 // pred_check
    _
  $region11: #{roberta_sim_forward.15} parent=0 // pred_check_branch
    %13 = sbr.rel (0) target = $region13
  $region12: #{roberta_sim_forward.15} parent=0 // pred_region
    _
  $region13: #{roberta_sim_forward.15} parent=0 // pred_fallthru
    _
  %p15 = scmp.eq.s32.totalorder 0, 0
  // Predicated region
  $region14: #{roberta_sim_forward.15} parent=0 // pred_check
    %p16 = pneg %p15
  $region15: #{roberta_sim_forward.15} parent=0 // pred_check_branch
    %18 = sbr.rel (%p16) target = $region17
  $region16: #{roberta_sim_forward.15} parent=0 // pred_region
    %vm19 = vcmask 523264
    %20 = vst.msk [vmem:[#allocation2] sm:$0xff] %vm19, 0.0
    %21 = vst.msk [vmem:[#allocation2 + $0x8] sm:$0xff] %vm19, 0.0
    %22 = vst.msk [vmem:[#allocation2 + $0x10] sm:$0xff] %vm19, 0.0
    %23 = vst.msk [vmem:[#allocation2 + $0x18] sm:$0xff] %vm19, 0.0
  $region17: #{roberta_sim_forward.15} parent=0 // pred_fallthru
    _
  %v24 = vld [vmem:[#allocation2] sm:$0xff]
  %v25 = vld [vmem:[#allocation2 + $0x8] sm:$0xff]
  %v26 = vld [vmem:[#allocation2 + $0x10] sm:$0xff]
  %v27 = vld [vmem:[#allocation2 + $0x18] sm:$0xff]
  %v28 = vld [vmem:[%s0] sm:$0xf]
  %v29 = vld [vmem:[%s0 + $0x4] sm:$0xf]
  %v30 = vld [vmem:[%s0 + $0x8] sm:$0xf]
  %v31 = vld [vmem:[%s0 + $0xc] sm:$0xf]
  %v32 = vld [vmem:[%s1] sm:$0xf]
  %v33 = vld [vmem:[%s1 + $0x4] sm:$0xf]
  %v34 = vld [vmem:[%s1 + $0x8] sm:$0xf]
  %v35 = vld [vmem:[%s1 + $0xc] sm:$0xf]
  %v40 = vunpack.c.l.b16 %v28
  %v41 = vunpack.c.l.b16 %v29
  %v42 = vunpack.c.l.b16 %v30
  %v43 = vunpack.c.l.b16 %v31
  %v44 = vpack.c.b16 %v41, %v40
  %v45 = vpack.c.b16 %v43, %v42
  %v50 = vunpack.c.l.b16 %v32
  %v51 = vunpack.c.l.b16 %v33
  %v52 = vunpack.c.l.b16 %v34
  %v53 = vunpack.c.l.b16 %v35
  %v54 = vpack.c.b16 %v51, %v50
  %v55 = vpack.c.b16 %v53, %v52
  %vm58 = vcmask 261120
  %v60 = vsel %vm58, %v44, 0
  %v63 = vsel %vm58, %v45, 0
  %65 = vmatpush.bf16.msra.mxu0 0
  %66 = vmatpush.bf16.msra.mxu0 0
  %67 = vmatpush.bf16.msra.mxu0 0
  %68 = vmatpush.bf16.msra.mxu0 0
  %69 = vmatpush.bf16.msra.mxu0 0
  %70 = vmatpush.bf16.msra.mxu0 0
  %71 = vmatpush.bf16.msra.mxu0 %v55
  %72 = vmatpush.bf16.msra.mxu0 %v54
  %73 = vmatmul.bf16.gmra.mxu0 %v60
  %v74 = vpop.f32.mrf.mxu0
  %v75 = vadd.f32 0.0, %v74
  %v76 = vpop.f32.mrf.mxu0
  %v77 = vadd.f32 0.0, %v76
  %78 = vmatmul.bf16.gmra.mxu0 %v63
  %v79 = vpop.f32.mrf.mxu0
  %v80 = vadd.f32 0.0, %v79
  %v81 = vpop.f32.mrf.mxu0
  %v82 = vadd.f32 0.0, %v81
  %83 = vdwg.mxu0
  %v84 = vadd.f32 %v24, %v75
  %v85 = vadd.f32 %v25, %v77
  %v86 = vadd.f32 %v26, %v80
  %v87 = vadd.f32 %v27, %v82
  %vm88 = vcmask 523264
  %89 = vst.msk [vmem:[#allocation2] sm:$0xff] %vm88, %v84
  %90 = vst.msk [vmem:[#allocation2 + $0x8] sm:$0xff] %vm88, %v85
  %91 = vst.msk [vmem:[#allocation2 + $0x10] sm:$0xff] %vm88, %v86
  %92 = vst.msk [vmem:[#allocation2 + $0x18] sm:$0xff] %vm88, %v87
  // Predicated region
  $region18: #{roberta_sim_forward.15} parent=0 // pred_check
    %p93 = pneg %p15
  $region19: #{roberta_sim_forward.15} parent=0 // pred_check_branch
    %95 = sbr.rel (%p93) target = $region21
  $region20: #{roberta_sim_forward.15} parent=0 // pred_region
    %v96 = vld [vmem:[#allocation2] sm:$0xff]
    %v97 = vld [vmem:[#allocation2 + $0x8] sm:$0xff]
    %v98 = vld [vmem:[#allocation2 + $0x10] sm:$0xff]
    %v99 = vld [vmem:[#allocation2 + $0x18] sm:$0xff]
    %v100 = vld [vmem:[%s2] sm:$0x1]
    %v102 = vperm.slane %v100, 0
    %v104 = vadd.f32 %v96, %v102
    %v105 = vadd.f32 %v97, %v102
    %v106 = vadd.f32 %v98, %v102
    %v107 = vadd.f32 %v99, %v102
    %v108 = vmul.f32 %v104, %v104
    %v109 = vmul.f32 %v105, %v105
    %v110 = vmul.f32 %v106, %v106
    %v111 = vmul.f32 %v107, %v107
    %v112 = vmul.f32 %v104, %v108
    %v113 = vmul.f32 %v105, %v109
    %v114 = vmul.f32 %v106, %v110
    %v115 = vmul.f32 %v107, %v111
    %v116 = vmul.f32 %v112, 0.044715
    %v117 = vmul.f32 %v113, 0.044715
    %v118 = vmul.f32 %v114, 0.044715
    %v119 = vmul.f32 %v115, 0.044715
    %v120 = vadd.f32 %v104, %v116
    %v121 = vadd.f32 %v105, %v117
    %v122 = vadd.f32 %v106, %v118
    %v123 = vadd.f32 %v107, %v119
    %v124 = vmul.f32 %v120, 0.7978846
    %v125 = vmul.f32 %v121, 0.7978846
    %v126 = vmul.f32 %v122, 0.7978846
    %v127 = vmul.f32 %v123, 0.7978846
    %v128 = vtanh.pop %v124
    %v129 = vtanh.pop %v125
    %v130 = vtanh.pop %v126
    %v131 = vtanh.pop %v127
    %v132 = vadd.f32 %v128, 1.0
    %v133 = vadd.f32 %v129, 1.0
    %v134 = vadd.f32 %v130, 1.0
    %v135 = vadd.f32 %v131, 1.0
    %v136 = vmul.f32 %v132, 0.5
    %v137 = vmul.f32 %v133, 0.5
    %v138 = vmul.f32 %v134, 0.5
    %v139 = vmul.f32 %v135, 0.5
    %v140 = vmul.f32 %v104, %v136
    %v141 = vmul.f32 %v105, %v137
    %v142 = vmul.f32 %v106, %v138
    %v143 = vmul.f32 %v107, %v139
    %v144 = vpack.c.bf16 %v140, %v140
    %v145 = vpack.c.bf16 %v141, %v141
    %v146 = vpack.c.bf16 %v142, %v142
    %v147 = vpack.c.bf16 %v143, %v143
    %vm148 = vcmask 519168
    %149 = vst.msk [vmem:[%s3] sm:$0xf] %vm148, %v144
    %150 = vst.msk [vmem:[%s3 + $0x4] sm:$0xf] %vm148, %v145
    %151 = vst.msk [vmem:[%s3 + $0x8] sm:$0xf] %vm148, %v146
    %152 = vst.msk [vmem:[%s3 + $0xc] sm:$0xf] %vm148, %v147
  $region21: #{roberta_sim_forward.15} parent=0 // pred_fallthru
    _
  // Predicated region
  $region22: #{roberta_sim_forward.15} parent=0 // pred_check
    _
  $region23: #{roberta_sim_forward.15} parent=0 // pred_check_branch
    %154 = sbr.rel (0) target = $region25
  $region24: #{roberta_sim_forward.15} parent=0 // pred_region
    _
  $region25: #{roberta_sim_forward.15} parent=0 // pred_fallthru
    _
  // Predicated region
  $region26: #{roberta_sim_forward.15} parent=0 // pred_check
    _
  $region27: #{roberta_sim_forward.15} parent=0 // pred_check_branch
    %156 = sbr.rel (0) target = $region29
  $region28: #{roberta_sim_forward.15} parent=0 // pred_region
    _
  $region29: #{roberta_sim_forward.15} parent=0 // pred_fallthru
    _

// kernel: roberta_sim_forward.16
$region0: #{roberta_sim_forward.16}
  #allocation0 [shape = 'u32[]', space=smem, size = 0x4, offset = 0x4, fixed_abs, tag = 'smem constant byte address 0x4 - core index']
  #allocation1 [shape = 'u32[72,128]{1,0:T(1,128)}', space=vmem, size = 0x9000, scoped, tag = 'internal scratch']
  #allocation2 [shape = 'f32[32,32]{1,0:T(8,128)}', space=vmem, size = 0x4000, scoped, tag = 'scratch operand']
  %s0 = inlined_call_operand.vmem [shape: bf16[32,64], index: 0, kind: input, shape index: {}]
  %s1 = inlined_call_operand.vmem [shape: bf16[64,32], index: 1, kind: input, shape index: {}]
  %s2 = inlined_call_operand.vmem [shape: f32[1,32], index: 2, kind: input, shape index: {}]
  %s3 = inlined_call_operand.vmem [shape: bf16[32,32], index: 3, kind: input, shape index: {}]
  %s4 = inlined_call_operand.vmem [shape: f32[1,32], index: 4, kind: input, shape index: {}]
  %s5 = inlined_call_operand.vmem [shape: f32[1,32], index: 5, kind: input, shape index: {}]
  %s6 = inlined_call_operand.vmem [shape: bf16[32,32], index: 6, kind: output, shape index: {}]
  %s7 = sld [smem:[#allocation0]]
  $region42: #{roberta_sim_forward.16} parent=0
    _
  %s9 = ssub.s32 1, %s7
  %s10 = scalar_select 0, %s9, %s7
  // Predicated region
  $region2: #{roberta_sim_forward.16} parent=0 // pred_check
    _
  $region3: #{roberta_sim_forward.16} parent=0 // pred_check_branch
    %12 = sbr.rel (0) target = $region5
  $region4: #{roberta_sim_forward.16} parent=0 // pred_region
    _
  $region5: #{roberta_sim_forward.16} parent=0 // pred_fallthru
    _
  // Predicated region
  $region6: #{roberta_sim_forward.16} parent=0 // pred_check
    _
  $region7: #{roberta_sim_forward.16} parent=0 // pred_check_branch
    %14 = sbr.rel (0) target = $region9
  $region8: #{roberta_sim_forward.16} parent=0 // pred_region
    _
  $region9: #{roberta_sim_forward.16} parent=0 // pred_fallthru
    _
  // Predicated region
  $region10: #{roberta_sim_forward.16} parent=0 // pred_check
    _
  $region11: #{roberta_sim_forward.16} parent=0 // pred_check_branch
    %16 = sbr.rel (0) target = $region13
  $region12: #{roberta_sim_forward.16} parent=0 // pred_region
    _
  $region13: #{roberta_sim_forward.16} parent=0 // pred_fallthru
    _
  // Predicated region
  $region14: #{roberta_sim_forward.16} parent=0 // pred_check
    _
  $region15: #{roberta_sim_forward.16} parent=0 // pred_check_branch
    %18 = sbr.rel (0) target = $region17
  $region16: #{roberta_sim_forward.16} parent=0 // pred_region
    _
  $region17: #{roberta_sim_forward.16} parent=0 // pred_fallthru
    _
  // Predicated region
  $region18: #{roberta_sim_forward.16} parent=0 // pred_check
    _
  $region19: #{roberta_sim_forward.16} parent=0 // pred_check_branch
    %20 = sbr.rel (0) target = $region21
  $region20: #{roberta_sim_forward.16} parent=0 // pred_region
    _
  $region21: #{roberta_sim_forward.16} parent=0 // pred_fallthru
    _
  // Predicated region
  $region22: #{roberta_sim_forward.16} parent=0 // pred_check
    _
  $region23: #{roberta_sim_forward.16} parent=0 // pred_check_branch
    %22 = sbr.rel (0) target = $region25
  $region24: #{roberta_sim_forward.16} parent=0 // pred_region
    _
  $region25: #{roberta_sim_forward.16} parent=0 // pred_fallthru
    _
  %p24 = scmp.eq.s32.totalorder 0, 0
  // Predicated region
  $region26: #{roberta_sim_forward.16} parent=0 // pred_check
    %p25 = pneg %p24
  $region27: #{roberta_sim_forward.16} parent=0 // pred_check_branch
    %27 = sbr.rel (%p25) target = $region29
  $region28: #{roberta_sim_forward.16} parent=0 // pred_region
    %vm28 = vcmask 261120
    %29 = vst.msk [vmem:[#allocation2] sm:$0xff] %vm28, 0.0
    %30 = vst.msk [vmem:[#allocation2 + $0x8] sm:$0xff] %vm28, 0.0
    %31 = vst.msk [vmem:[#allocation2 + $0x10] sm:$0xff] %vm28, 0.0
    %32 = vst.msk [vmem:[#allocation2 + $0x18] sm:$0xff] %vm28, 0.0
  $region29: #{roberta_sim_forward.16} parent=0 // pred_fallthru
    _
  %v33 = vld [vmem:[#allocation2] sm:$0xff]
  %v34 = vld [vmem:[#allocation2 + $0x8] sm:$0xff]
  %v35 = vld [vmem:[#allocation2 + $0x10] sm:$0xff]
  %v36 = vld [vmem:[#allocation2 + $0x18] sm:$0xff]
  %v37 = vld [vmem:[%s0] sm:$0xf]
  %v38 = vld [vmem:[%s0 + $0x4] sm:$0xf]
  %v39 = vld [vmem:[%s0 + $0x8] sm:$0xf]
  %v40 = vld [vmem:[%s0 + $0xc] sm:$0xf]
  %v41 = vld [vmem:[%s1] sm:$0xf]
  %v42 = vld [vmem:[%s1 + $0x4] sm:$0xf]
  %v43 = vld [vmem:[%s1 + $0x8] sm:$0xf]
  %v44 = vld [vmem:[%s1 + $0xc] sm:$0xf]
  %v45 = vld [vmem:[%s1 + $0x10] sm:$0xf]
  %v46 = vld [vmem:[%s1 + $0x14] sm:$0xf]
  %v47 = vld [vmem:[%s1 + $0x18] sm:$0xf]
  %v48 = vld [vmem:[%s1 + $0x1c] sm:$0xf]
  %v53 = vunpack.c.l.b16 %v37
  %v54 = vunpack.c.l.b16 %v38
  %v55 = vunpack.c.l.b16 %v39
  %v56 = vunpack.c.l.b16 %v40
  %v57 = vpack.c.b16 %v54, %v53
  %v58 = vpack.c.b16 %v56, %v55
  %v67 = vunpack.c.l.b16 %v41
  %v68 = vunpack.c.l.b16 %v42
  %v69 = vunpack.c.l.b16 %v43
  %v70 = vunpack.c.l.b16 %v44
  %v71 = vunpack.c.l.b16 %v45
  %v72 = vunpack.c.l.b16 %v46
  %v73 = vunpack.c.l.b16 %v47
  %v74 = vunpack.c.l.b16 %v48
  %v75 = vpack.c.b16 %v68, %v67
  %v76 = vpack.c.b16 %v70, %v69
  %v77 = vpack.c.b16 %v72, %v71
  %v78 = vpack.c.b16 %v74, %v73
  %vm83 = vcmask 523264
  %v85 = vsel %vm83, %v57, 0
  %v88 = vsel %vm83, %v58, 0
  %90 = vmatpush.bf16.msra.mxu0 0
  %91 = vmatpush.bf16.msra.mxu0 0
  %92 = vmatpush.bf16.msra.mxu0 0
  %93 = vmatpush.bf16.msra.mxu0 0
  %94 = vmatpush.bf16.msra.mxu0 %v78
  %95 = vmatpush.bf16.msra.mxu0 %v77
  %96 = vmatpush.bf16.msra.mxu0 %v76
  %97 = vmatpush.bf16.msra.mxu0 %v75
  %98 = vmatmul.bf16.gmra.mxu0 %v85
  %v99 = vpop.f32.mrf.mxu0
  %v100 = vadd.f32 0.0, %v99
  %v101 = vpop.f32.mrf.mxu0
  %v102 = vadd.f32 0.0, %v101
  %103 = vmatmul.bf16.gmra.mxu0 %v88
  %v104 = vpop.f32.mrf.mxu0
  %v105 = vadd.f32 0.0, %v104
  %v106 = vpop.f32.mrf.mxu0
  %v107 = vadd.f32 0.0, %v106
  %108 = vdwg.mxu0
  %v109 = vadd.f32 %v33, %v100
  %v110 = vadd.f32 %v34, %v102
  %v111 = vadd.f32 %v35, %v105
  %v112 = vadd.f32 %v36, %v107
  %vm113 = vcmask 261120
  %114 = vst.msk [vmem:[#allocation2] sm:$0xff] %vm113, %v109
  %115 = vst.msk [vmem:[#allocation2 + $0x8] sm:$0xff] %vm113, %v110
  %116 = vst.msk [vmem:[#allocation2 + $0x10] sm:$0xff] %vm113, %v111
  %117 = vst.msk [vmem:[#allocation2 + $0x18] sm:$0xff] %vm113, %v112
  // Predicated region
  $region30: #{roberta_sim_forward.16} parent=0 // pred_check
    %p118 = pneg %p24
  $region31: #{roberta_sim_forward.16} parent=0 // pred_check_branch
    %120 = sbr.rel (%p118) target = $region33
  $region32: #{roberta_sim_forward.16} parent=0 // pred_region
    %v121 = vld [vmem:[#allocation2] sm:$0xff]
    %v122 = vld [vmem:[#allocation2 + $0x8] sm:$0xff]
    %v123 = vld [vmem:[#allocation2 + $0x10] sm:$0xff]
    %v124 = vld [vmem:[#allocation2 + $0x18] sm:$0xff]
    %v125 = vld [vmem:[%s2] sm:$0x1]
    %v127 = vperm.slane %v125, 0
    %v129 = vadd.f32 %v121, %v127
    %v130 = vadd.f32 %v122, %v127
    %v131 = vadd.f32 %v123, %v127
    %v132 = vadd.f32 %v124, %v127
    %v133 = vld [vmem:[%s3] sm:$0xf]
    %v134 = vld [vmem:[%s3 + $0x4] sm:$0xf]
    %v135 = vld [vmem:[%s3 + $0x8] sm:$0xf]
    %v136 = vld [vmem:[%s3 + $0xc] sm:$0xf]
    %v137 = vunpack.c.l.bf16 %v133
    %v138 = vunpack.c.l.bf16 %v134
    %v139 = vunpack.c.l.bf16 %v135
    %v140 = vunpack.c.l.bf16 %v136
    %v141 = vadd.f32 %v129, %v137
    %v142 = vadd.f32 %v130, %v138
    %v143 = vadd.f32 %v131, %v139
    %v144 = vadd.f32 %v132, %v140
    %v145 = vsel %vm113, %v141, 0.0
    %146 = vadd.xlane.f32.xlu0 %v145
    %v147 = vpop.xlane.xlu0 %146
    %v148 = vsel %vm113, %v142, 0.0
    %149 = vadd.xlane.f32.xlu0 %v148
    %v150 = vpop.xlane.xlu0 %149
    %v151 = vsel %vm113, %v143, 0.0
    %152 = vadd.xlane.f32.xlu0 %v151
    %v153 = vpop.xlane.xlu0 %152
    %v154 = vsel %vm113, %v144, 0.0
    %155 = vadd.xlane.f32.xlu0 %v154
    %v156 = vpop.xlane.xlu0 %155
    %v157 = vrcp.pop 32.0
    %v158 = vmul.f32 32.0, %v157
    %v159 = vsub.f32 1.0, %v158
    %v160 = vmul.f32 %v157, %v159
    %v161 = vadd.f32 %v157, %v160
    %vm162 = vweird.f32 %v157
    %v163 = vsel %vm162, %v157, %v161
    %v164 = vmul.f32 %v147, %v163
    %v165 = vmul.f32 %v150, %v163
    %v166 = vmul.f32 %v153, %v163
    %v167 = vmul.f32 %v156, %v163
    %v168 = vsub.f32 %v141, %v164
    %v169 = vsub.f32 %v142, %v165
    %v170 = vsub.f32 %v143, %v166
    %v171 = vsub.f32 %v144, %v167
    %v172 = vmul.f32 %v168, %v168
    %v173 = vmul.f32 %v169, %v169
    %v174 = vmul.f32 %v170, %v170
    %v175 = vmul.f32 %v171, %v171
    %v176 = vsel %vm113, %v172, 0.0
    %177 = vadd.xlane.f32.xlu0 %v176
    %v178 = vpop.xlane.xlu0 %177
    %v179 = vsel %vm113, %v173, 0.0
    %180 = vadd.xlane.f32.xlu0 %v179
    %v181 = vpop.xlane.xlu0 %180
    %v182 = vsel %vm113, %v174, 0.0
    %183 = vadd.xlane.f32.xlu0 %v182
    %v184 = vpop.xlane.xlu0 %183
    %v185 = vsel %vm113, %v175, 0.0
    %186 = vadd.xlane.f32.xlu0 %v185
    %v187 = vpop.xlane.xlu0 %186
    %v188 = vmul.f32 %v178, %v163
    %v189 = vmul.f32 %v181, %v163
    %v190 = vmul.f32 %v184, %v163
    %v191 = vmul.f32 %v187, %v163
    %v192 = vadd.f32 %v188, 1e-05
    %v193 = vadd.f32 %v189, 1e-05
    %v194 = vadd.f32 %v190, 1e-05
    %v195 = vadd.f32 %v191, 1e-05
    %v196 = vrsqrt.pop %v192
    %v197 = vmul.f32 %v196, %v192
    %v198 = vmul.f32 %v197, %v196
    %v199 = vmul.f32 0.5, %v198
    %v200 = vsub.f32 1.5, %v199
    %v201 = vmul.f32 %v196, %v200
    %vm202 = vweird.f32 %v192
    %vm203 = vweird.f32 %v196
    %vm204 = vmor %vm202, %vm203
    %v205 = vsel %vm204, %v196, %v201
    %v206 = vrsqrt.pop %v193
    %v207 = vmul.f32 %v206, %v193
    %v208 = vmul.f32 %v207, %v206
    %v209 = vmul.f32 0.5, %v208
    %v210 = vsub.f32 1.5, %v209
    %v211 = vmul.f32 %v206, %v210
    %vm212 = vweird.f32 %v193
    %vm213 = vweird.f32 %v206
    %vm214 = vmor %vm212, %vm213
    %v215 = vsel %vm214, %v206, %v211
    %v216 = vrsqrt.pop %v194
    %v217 = vmul.f32 %v216, %v194
    %v218 = vmul.f32 %v217, %v216
    %v219 = vmul.f32 0.5, %v218
    %v220 = vsub.f32 1.5, %v219
    %v221 = vmul.f32 %v216, %v220
    %vm222 = vweird.f32 %v194
    %vm223 = vweird.f32 %v216
    %vm224 = vmor %vm222, %vm223
    %v225 = vsel %vm224, %v216, %v221
    %v226 = vrsqrt.pop %v195
    %v227 = vmul.f32 %v226, %v195
    %v228 = vmul.f32 %v227, %v226
    %v229 = vmul.f32 0.5, %v228
    %v230 = vsub.f32 1.5, %v229
    %v231 = vmul.f32 %v226, %v230
    %vm232 = vweird.f32 %v195
    %vm233 = vweird.f32 %v226
    %vm234 = vmor %vm232, %vm233
    %v235 = vsel %vm234, %v226, %v231
    %v236 = vmul.f32 %v168, %v205
    %v237 = vmul.f32 %v169, %v215
    %v238 = vmul.f32 %v170, %v225
    %v239 = vmul.f32 %v171, %v235
    %v240 = vld [vmem:[%s4] sm:$0x1]
    %v242 = vperm.slane %v240, 0
    %v244 = vmul.f32 %v236, %v242
    %v245 = vmul.f32 %v237, %v242
    %v246 = vmul.f32 %v238, %v242
    %v247 = vmul.f32 %v239, %v242
    %v248 = vld [vmem:[%s5] sm:$0x1]
    %v250 = vperm.slane %v248, 0
    %v252 = vadd.f32 %v244, %v250
    %v253 = vadd.f32 %v245, %v250
    %v254 = vadd.f32 %v246, %v250
    %v255 = vadd.f32 %v247, %v250
    %v256 = vpack.c.bf16 %v252, %v252
    %v257 = vpack.c.bf16 %v253, %v253
    %v258 = vpack.c.bf16 %v254, %v254
    %v259 = vpack.c.bf16 %v255, %v255
    %vm260 = vcmask 257024
    %261 = vst.msk [vmem:[%s6] sm:$0xf] %vm260, %v256
    %262 = vst.msk [vmem:[%s6 + $0x4] sm:$0xf] %vm260, %v257
    %263 = vst.msk [vmem:[%s6 + $0x8] sm:$0xf] %vm260, %v258
    %264 = vst.msk [vmem:[%s6 + $0xc] sm:$0xf] %vm260, %v259
  $region33: #{roberta_sim_forward.16} parent=0 // pred_fallthru
    _
  // Predicated region
  $region34: #{roberta_sim_forward.16} parent=0 // pred_check
    _
  $region35: #{roberta_sim_forward.16} parent=0 // pred_check_branch
    %266 = sbr.rel (0) target = $region37
  $region36: #{roberta_sim_forward.16} parent=0 // pred_region
    _
  $region37: #{roberta_sim_forward.16} parent=0 // pred_fallthru
    _
  // Predicated region
  $region38: #{roberta_sim_forward.16} parent=0 // pred_check
    _
  $region39: #{roberta_sim_forward.16} parent=0 // pred_check_branch
    %268 = sbr.rel (0) target = $region41
  $region40: #{roberta_sim_forward.16} parent=0 // pred_region
    _
  $region41: #{roberta_sim_forward.16} parent=0 // pred_fallthru
    _

</llo_original>
